<compile_context>
chip_gen: v7x
topology: tpu7x:2x2x1
jax: 0.10.0
libtpu: 0.0.40
codegen_flags: <defaults>
</compile_context>

<pallas_src>
import functools

import jax
import jax.numpy as jnp
from jax.experimental import pallas as pl
from jax.experimental.pallas import tpu as pltpu


def _round_up(n, m):
    return (n + m - 1) // m * m


def _gcn_kernel(x_ref, wl1_ref, wr1_ref, wlr2_ref, ml2_ref, mr1_ref, o_ref,
                sl1_ref, sr1_ref, s2_ref, *, H, W, k, F, Cin, Co):
    # x_ref   : (F, Cin, Sxg)      guarded, H-padded, flattened input images
    # wl1_ref : (Co, Kl1)          tap-stacked conv_l1 weights + bias col (+pad)
    # wr1_ref : (Co, Kl1)          tap-stacked conv_r1 weights + bias col (+pad)
    # wlr2_ref: (Co, K2)           [conv_l2 | conv_r2 | bl2+br2] stacked (+pad)
    # ml2_ref : (k, H*W)           per-tap column-validity masks for conv_l2
    # mr1_ref : (1, Hc*W)          column-extent mask for conv_r1 output
    # o_ref   : (F, Co, H*W)
    # s*_ref  : VMEM staging scratch for the fused-tap matmul sources
    pad = (k - 1) // 2
    ext = 2 * pad
    HW = H * W
    HcW = (H + ext) * W
    C1 = HW + ext                       # conv_l1 output canvas width
    dt = sl1_ref.dtype
    n1 = k * Cin                        # real contraction rows, conv_*1
    n2 = 2 * k * Co                     # real contraction rows, fused l2+r2
    Kl1 = sl1_ref.shape[0]              # padded to a multiple of 8
    K2 = s2_ref.shape[0]

    # Constant-1 bias rows + zero K-padding rows.  Rewritten every grid step so
    # megacore cores never depend on another core's scratch state.
    sl1_ref[n1:n1 + 1, :] = jnp.ones((1, C1), dt)
    sr1_ref[n1:n1 + 1, :] = jnp.ones((1, HcW), dt)
    s2_ref[n2:n2 + 1, :] = jnp.ones((1, HW), dt)
    if Kl1 - n1 - 1 > 0:
        sl1_ref[n1 + 1:Kl1, :] = jnp.zeros((Kl1 - n1 - 1, C1), dt)
        sr1_ref[n1 + 1:Kl1, :] = jnp.zeros((Kl1 - n1 - 1, HcW), dt)
    if K2 - n2 - 1 > 0:
        s2_ref[n2 + 1:K2, :] = jnp.zeros((K2 - n2 - 1, HW), dt)

    for f in range(F):                  # images folded into this grid step
        xf = x_ref[f]                   # (Cin, Sxg)

        # ---- stage the k shifted views (one pass; dots then read aligned) ----
        for t in range(k):
            # conv_l1: vertical taps -> shifts by t*W on the flat canvas.
            sl1_ref[t * Cin:(t + 1) * Cin, :] = xf[:, t * W: t * W + C1]
            # conv_r1: horizontal taps -> shifts by t.
            sr1_ref[t * Cin:(t + 1) * Cin, :] = xf[:, t: t + HcW]

        # One matmul per first-stage conv, bias folded in via the ones row.
        l1 = jnp.dot(wl1_ref[...], sl1_ref[...],
                     preferred_element_type=jnp.float32)         # (Co, C1)
        r1 = jnp.dot(wr1_ref[...], sr1_ref[...],
                     preferred_element_type=jnp.float32)         # (Co, HcW)
        # conv_r1 has no W padding: mask the canvas to its valid width so the
        # zero columns become conv_r2's W zero-padding.
        r1 = r1 * mr1_ref[...]

        # ---- stage the fused conv_l2 + conv_r2 source ----
        for t in range(k):
            # conv_l2 taps: W-shifts of l1; zero W-padding folded into the
            # STAGED SOURCE via the per-tap column mask (also kills the
            # garbage+bias guard columns of the extended l1 canvas).
            s2_ref[t * Co:(t + 1) * Co, :] = (
                l1[:, t: t + HW] * ml2_ref[t: t + 1, :]).astype(dt)
            # conv_r2 taps: vertical shifts of the (already masked) r1 canvas.
            s2_ref[(k + t) * Co:(k + t + 1) * Co, :] = (
                r1[:, t * W: t * W + HW]).astype(dt)

        # Single matmul producing conv_l2(l1) + conv_r2(r1) + (bl2 + br2).
        out = jnp.dot(wlr2_ref[...], s2_ref[...],
                      preferred_element_type=jnp.float32)        # (Co, HW)
        o_ref[f] = out.astype(o_ref.dtype)


def gcn_forward(x, params, k=7, mxu_dtype=jnp.float32):
    """x: (B, Cin, H, W) f32; params: ((wl1,bl1),(wl2,bl2),(wr1,br1),(wr2,br2))
    with PyTorch Conv2d weight layouts."""
    (wl1, bl1), (wl2, bl2), (wr1, br1), (wr2, br2) = params
    B, Cin, H, W = x.shape
    Co = wl1.shape[0]
    pad = (k - 1) // 2
    ext = 2 * pad
    Hc = H + ext
    HW, HcW = H * W, Hc * W
    C1 = HW + ext
    Sxg = HcW + ext

    # Fold images per grid step; keep >=2 steps when B>=2 (one per v7x core).
    steps = 2 if B >= 2 else 1
    F = B // steps if B % steps == 0 else 1
    steps = B // F

    # Zero-pad H by `pad` (both first convs use H padding), flatten spatially
    # (H-major), add `pad` guard zeros at each end of the flat axis.
    xg = jnp.pad(x, ((0, 0), (0, 0), (pad, pad), (0, 0))).reshape(B, Cin, HcW)
    xg = jnp.pad(xg, ((0, 0), (0, 0), (pad, pad))).astype(mxu_dtype)  # (B,Cin,Sxg)

    # Tap-stacked weights with the bias folded in as an extra column (matched
    # by a constant-1 row in the staged sources); zero-padded along K to a
    # multiple of 8 so the MXU operands stay sublane-aligned.
    def stack_taps(w_tl):               # (Co, Ci, k) tap-last -> (Co, k*Ci)
        co, ci, kk = w_tl.shape
        return jnp.transpose(w_tl, (0, 2, 1)).reshape(co, kk * ci)

    def pad_k(w, kp):
        return jnp.pad(w, ((0, 0), (0, kp - w.shape[1])))

    Kl1 = _round_up(k * Cin + 1, 8)
    K2 = _round_up(2 * k * Co + 1, 8)
    wl1s = pad_k(jnp.concatenate([stack_taps(wl1[:, :, :, 0]), bl1[:, None]], 1), Kl1)
    wr1s = pad_k(jnp.concatenate([stack_taps(wr1[:, :, 0, :]), br1[:, None]], 1), Kl1)
    wlr2s = pad_k(jnp.concatenate([stack_taps(wl2[:, :, 0, :]),
                                   stack_taps(wr2[:, :, :, 0]),
                                   (bl2 + br2)[:, None]], 1), K2)
    wl1s = wl1s.astype(mxu_dtype)
    wr1s = wr1s.astype(mxu_dtype)
    wlr2s = wlr2s.astype(mxu_dtype)

    # Column-validity masks (zero W-padding), precomputed once in the wrapper.
    wcol_hw = jnp.arange(HW, dtype=jnp.int32) % W
    ml2 = jnp.stack([((wcol_hw + t - pad >= 0) & (wcol_hw + t - pad < W))
                     for t in range(k)]).astype(jnp.float32)          # (k, HW)
    wcol_hc = jnp.arange(HcW, dtype=jnp.int32) % W
    mr1 = (((wcol_hc >= pad) & (wcol_hc < W - pad))
           .astype(jnp.float32).reshape(1, HcW))                      # (1, HcW)

    kernel = functools.partial(_gcn_kernel, H=H, W=W, k=k, F=F, Cin=Cin, Co=Co)

    out_flat = pl.pallas_call(
        kernel,
        out_shape=jax.ShapeDtypeStruct((B, Co, HW), jnp.float32),
        grid_spec=pltpu.PrefetchScalarGridSpec(
            num_scalar_prefetch=0,
            grid=(steps,),
            in_specs=[
                pl.BlockSpec((F, Cin, Sxg), lambda b: (b, 0, 0)),
                pl.BlockSpec((Co, Kl1), lambda b: (0, 0)),
                pl.BlockSpec((Co, Kl1), lambda b: (0, 0)),
                pl.BlockSpec((Co, K2), lambda b: (0, 0)),
                pl.BlockSpec((k, HW), lambda b: (0, 0)),
                pl.BlockSpec((1, HcW), lambda b: (0, 0)),
            ],
            out_specs=pl.BlockSpec((F, Co, HW), lambda b: (b, 0, 0)),
            scratch_shapes=[
                pltpu.VMEM((Kl1, C1), mxu_dtype),    # staged conv_l1 source
                pltpu.VMEM((Kl1, HcW), mxu_dtype),   # staged conv_r1 source
                pltpu.VMEM((K2, HW), mxu_dtype),     # staged fused l2+r2 source
            ],
        ),
        compiler_params=pltpu.CompilerParams(
            dimension_semantics=("parallel",),
            vmem_limit_bytes=32 * 1024 * 1024,
        ),
    )(xg, wl1s, wr1s, wlr2s, ml2, mr1)

    return out_flat.reshape(B, Co, H, W)


# ---------------- pure-JAX reference (mirrors the PyTorch module) -------------
def _conv_ref(x, w, b, ph, pw):
    y = jax.lax.conv_general_dilated(
        x, w, window_strides=(1, 1),
        padding=((ph, ph), (pw, pw)),
        dimension_numbers=("NCHW", "OIHW", "NCHW"),
        precision=jax.lax.Precision.HIGHEST)
    return y + b[None, :, None, None]


def gcn_reference(x, params, k=7):
    (wl1, bl1), (wl2, bl2), (wr1, br1), (wr2, br2) = params
    p = (k - 1) // 2
    xl = _conv_ref(x, wl1, bl1, p, 0)
    xl = _conv_ref(xl, wl2, bl2, 0, p)
    xr = _conv_ref(x, wr1, br1, p, 0)     # padding quirk of the module kept
    xr = _conv_ref(xr, wr2, br2, 0, p)    # padding quirk of the module kept
    return xl + xr


if __name__ == "__main__":
    B, Cin, Co, H, W, k = 2, 8, 8, 16, 16, 7

    key = jax.random.PRNGKey(0)
    keys = jax.random.split(key, 9)

    def mk(kk, shape, scale=0.1):
        return scale * jax.random.normal(kk, shape, dtype=jnp.float32)

    x = jax.random.normal(keys[0], (B, Cin, H, W), dtype=jnp.float32)
    wl1, bl1 = mk(keys[1], (Co, Cin, k, 1)), mk(keys[2], (Co,))
    wl2, bl2 = mk(keys[3], (Co, Co, 1, k)), mk(keys[4], (Co,))
    wr1, br1 = mk(keys[5], (Co, Cin, 1, k)), mk(keys[6], (Co,))
    wr2, br2 = mk(keys[7], (Co, Co, k, 1)), mk(keys[8], (Co,))
    params = ((wl1, bl1), (wl2, bl2), (wr1, br1), (wr2, br2))

    out = jax.block_until_ready(gcn_forward(x, params, k=k))
    ref = gcn_reference(x, params, k=k)

    assert out.shape == (B, Co, H, W)
    err = jnp.max(jnp.abs(out - ref))
    assert jnp.allclose(out, ref, atol=1e-3, rtol=1e-3), (
        f"mismatch vs reference, max abs err = {err}")

    print("KERNEL_OK")
</pallas_src>

<mosaic_0001>
module attributes {stable_mosaic.version = 11 : i64} {
  func.func @_gcn_kernel(%arg0: i32, %arg1: memref<1x8x358xf32, #tpu.memory_space<vmem>>, %arg2: memref<8x64xf32, #tpu.memory_space<vmem>>, %arg3: memref<8x64xf32, #tpu.memory_space<vmem>>, %arg4: memref<8x120xf32, #tpu.memory_space<vmem>>, %arg5: memref<7x256xf32, #tpu.memory_space<vmem>>, %arg6: memref<1x352xf32, #tpu.memory_space<vmem>>, %arg7: memref<1x8x256xf32, #tpu.memory_space<vmem>>, %arg8: memref<64x262xf32, #tpu.memory_space<vmem>>, %arg9: memref<64x352xf32, #tpu.memory_space<vmem>>, %arg10: memref<120x256xf32, #tpu.memory_space<vmem>>) attributes {dimension_semantics = [#tpu.dimension_semantics<parallel>], iteration_bounds = array<i64: 2>, scalar_prefetch = 0 : i64, scratch_operands = 3 : i64, tpu.core_type = #tpu.core_type<tc>, window_params = [{transform_indices = @transform_0, window_bounds = array<i64: 1, 8, 358>}, {pipeline_mode = #tpu.pipeline_mode<synchronous>, transform_indices = @transform_1, window_bounds = array<i64: 8, 64>}, {pipeline_mode = #tpu.pipeline_mode<synchronous>, transform_indices = @transform_2, window_bounds = array<i64: 8, 64>}, {pipeline_mode = #tpu.pipeline_mode<synchronous>, transform_indices = @transform_3, window_bounds = array<i64: 8, 120>}, {pipeline_mode = #tpu.pipeline_mode<synchronous>, transform_indices = @transform_4, window_bounds = array<i64: 7, 256>}, {pipeline_mode = #tpu.pipeline_mode<synchronous>, transform_indices = @transform_5, window_bounds = array<i64: 1, 352>}, {transform_indices = @transform_6, window_bounds = array<i64: 1, 8, 256>}]} {
    %cst = arith.constant 1.000000e+00 : f32
    %0 = vector.broadcast %cst : f32 to vector<1x262xf32>
    %c56 = arith.constant 56 : index
    %c0 = arith.constant 0 : index
    %1 = vector.load %arg8[%c56, %c0] : memref<64x262xf32, #tpu.memory_space<vmem>>, vector<1x262xf32>
    tpu.vector_store %arg8[%c56, %c0], %0 {strides = array<i32>} : memref<64x262xf32, #tpu.memory_space<vmem>>, vector<1x262xf32>,
    %cst_0 = arith.constant 1.000000e+00 : f32
    %2 = vector.broadcast %cst_0 : f32 to vector<1x352xf32>
    %c56_1 = arith.constant 56 : index
    %c0_2 = arith.constant 0 : index
    %3 = vector.load %arg9[%c56_1, %c0_2] : memref<64x352xf32, #tpu.memory_space<vmem>>, vector<1x352xf32>
    tpu.vector_store %arg9[%c56_1, %c0_2], %2 {strides = array<i32>} : memref<64x352xf32, #tpu.memory_space<vmem>>, vector<1x352xf32>,
    %cst_3 = arith.constant 1.000000e+00 : f32
    %4 = vector.broadcast %cst_3 : f32 to vector<1x256xf32>
    %c112 = arith.constant 112 : index
    %c0_4 = arith.constant 0 : index
    %5 = vector.load %arg10[%c112, %c0_4] : memref<120x256xf32, #tpu.memory_space<vmem>>, vector<1x256xf32>
    tpu.vector_store %arg10[%c112, %c0_4], %4 {strides = array<i32>} : memref<120x256xf32, #tpu.memory_space<vmem>>, vector<1x256xf32>,
    %cst_5 = arith.constant 0.000000e+00 : f32
    %6 = vector.broadcast %cst_5 : f32 to vector<7x262xf32>
    %c57 = arith.constant 57 : index
    %c0_6 = arith.constant 0 : index
    %7 = vector.load %arg8[%c57, %c0_6] : memref<64x262xf32, #tpu.memory_space<vmem>>, vector<7x262xf32>
    tpu.vector_store %arg8[%c57, %c0_6], %6 {strides = array<i32>} : memref<64x262xf32, #tpu.memory_space<vmem>>, vector<7x262xf32>,
    %cst_7 = arith.constant 0.000000e+00 : f32
    %8 = vector.broadcast %cst_7 : f32 to vector<7x352xf32>
    %c57_8 = arith.constant 57 : index
    %c0_9 = arith.constant 0 : index
    %9 = vector.load %arg9[%c57_8, %c0_9] : memref<64x352xf32, #tpu.memory_space<vmem>>, vector<7x352xf32>
    tpu.vector_store %arg9[%c57_8, %c0_9], %8 {strides = array<i32>} : memref<64x352xf32, #tpu.memory_space<vmem>>, vector<7x352xf32>,
    %cst_10 = arith.constant 0.000000e+00 : f32
    %10 = vector.broadcast %cst_10 : f32 to vector<7x256xf32>
    %c113 = arith.constant 113 : index
    %c0_11 = arith.constant 0 : index
    %11 = vector.load %arg10[%c113, %c0_11] : memref<120x256xf32, #tpu.memory_space<vmem>>, vector<7x256xf32>
    tpu.vector_store %arg10[%c113, %c0_11], %10 {strides = array<i32>} : memref<120x256xf32, #tpu.memory_space<vmem>>, vector<7x256xf32>,
    %c0_12 = arith.constant 0 : index
    %c0_13 = arith.constant 0 : index
    %c0_14 = arith.constant 0 : index
    %12 = vector.load %arg1[%c0_12, %c0_13, %c0_14] : memref<1x8x358xf32, #tpu.memory_space<vmem>>, vector<1x8x358xf32>
    %13 = vector.shape_cast %12 : vector<1x8x358xf32> to vector<8x358xf32>
    %14 = vector.extract_strided_slice %13 {offsets = [0, 0], sizes = [8, 262], strides = [1, 1]} : vector<8x358xf32> to vector<8x262xf32>
    %c0_15 = arith.constant 0 : index
    %c0_16 = arith.constant 0 : index
    %15 = vector.load %arg8[%c0_15, %c0_16] : memref<64x262xf32, #tpu.memory_space<vmem>>, vector<8x262xf32>
    tpu.vector_store %arg8[%c0_15, %c0_16], %14 {strides = array<i32>} : memref<64x262xf32, #tpu.memory_space<vmem>>, vector<8x262xf32>,
    %16 = vector.extract_strided_slice %13 {offsets = [0, 0], sizes = [8, 352], strides = [1, 1]} : vector<8x358xf32> to vector<8x352xf32>
    %c0_17 = arith.constant 0 : index
    %c0_18 = arith.constant 0 : index
    %17 = vector.load %arg9[%c0_17, %c0_18] : memref<64x352xf32, #tpu.memory_space<vmem>>, vector<8x352xf32>
    tpu.vector_store %arg9[%c0_17, %c0_18], %16 {strides = array<i32>} : memref<64x352xf32, #tpu.memory_space<vmem>>, vector<8x352xf32>,
    %18 = vector.extract_strided_slice %13 {offsets = [0, 16], sizes = [8, 262], strides = [1, 1]} : vector<8x358xf32> to vector<8x262xf32>
    %c8 = arith.constant 8 : index
    %c0_19 = arith.constant 0 : index
    %19 = vector.load %arg8[%c8, %c0_19] : memref<64x262xf32, #tpu.memory_space<vmem>>, vector<8x262xf32>
    tpu.vector_store %arg8[%c8, %c0_19], %18 {strides = array<i32>} : memref<64x262xf32, #tpu.memory_space<vmem>>, vector<8x262xf32>,
    %20 = vector.extract_strided_slice %13 {offsets = [0, 1], sizes = [8, 352], strides = [1, 1]} : vector<8x358xf32> to vector<8x352xf32>
    %c8_20 = arith.constant 8 : index
    %c0_21 = arith.constant 0 : index
    %21 = vector.load %arg9[%c8_20, %c0_21] : memref<64x352xf32, #tpu.memory_space<vmem>>, vector<8x352xf32>
    tpu.vector_store %arg9[%c8_20, %c0_21], %20 {strides = array<i32>} : memref<64x352xf32, #tpu.memory_space<vmem>>, vector<8x352xf32>,
    %22 = vector.extract_strided_slice %13 {offsets = [0, 32], sizes = [8, 262], strides = [1, 1]} : vector<8x358xf32> to vector<8x262xf32>
    %c16 = arith.constant 16 : index
    %c0_22 = arith.constant 0 : index
    %23 = vector.load %arg8[%c16, %c0_22] : memref<64x262xf32, #tpu.memory_space<vmem>>, vector<8x262xf32>
    tpu.vector_store %arg8[%c16, %c0_22], %22 {strides = array<i32>} : memref<64x262xf32, #tpu.memory_space<vmem>>, vector<8x262xf32>,
    %24 = vector.extract_strided_slice %13 {offsets = [0, 2], sizes = [8, 352], strides = [1, 1]} : vector<8x358xf32> to vector<8x352xf32>
    %c16_23 = arith.constant 16 : index
    %c0_24 = arith.constant 0 : index
    %25 = vector.load %arg9[%c16_23, %c0_24] : memref<64x352xf32, #tpu.memory_space<vmem>>, vector<8x352xf32>
    tpu.vector_store %arg9[%c16_23, %c0_24], %24 {strides = array<i32>} : memref<64x352xf32, #tpu.memory_space<vmem>>, vector<8x352xf32>,
    %26 = vector.extract_strided_slice %13 {offsets = [0, 48], sizes = [8, 262], strides = [1, 1]} : vector<8x358xf32> to vector<8x262xf32>
    %c24 = arith.constant 24 : index
    %c0_25 = arith.constant 0 : index
    %27 = vector.load %arg8[%c24, %c0_25] : memref<64x262xf32, #tpu.memory_space<vmem>>, vector<8x262xf32>
    tpu.vector_store %arg8[%c24, %c0_25], %26 {strides = array<i32>} : memref<64x262xf32, #tpu.memory_space<vmem>>, vector<8x262xf32>,
    %28 = vector.extract_strided_slice %13 {offsets = [0, 3], sizes = [8, 352], strides = [1, 1]} : vector<8x358xf32> to vector<8x352xf32>
    %c24_26 = arith.constant 24 : index
    %c0_27 = arith.constant 0 : index
    %29 = vector.load %arg9[%c24_26, %c0_27] : memref<64x352xf32, #tpu.memory_space<vmem>>, vector<8x352xf32>
    tpu.vector_store %arg9[%c24_26, %c0_27], %28 {strides = array<i32>} : memref<64x352xf32, #tpu.memory_space<vmem>>, vector<8x352xf32>,
    %30 = vector.extract_strided_slice %13 {offsets = [0, 64], sizes = [8, 262], strides = [1, 1]} : vector<8x358xf32> to vector<8x262xf32>
    %c32 = arith.constant 32 : index
    %c0_28 = arith.constant 0 : index
    %31 = vector.load %arg8[%c32, %c0_28] : memref<64x262xf32, #tpu.memory_space<vmem>>, vector<8x262xf32>
    tpu.vector_store %arg8[%c32, %c0_28], %30 {strides = array<i32>} : memref<64x262xf32, #tpu.memory_space<vmem>>, vector<8x262xf32>,
    %32 = vector.extract_strided_slice %13 {offsets = [0, 4], sizes = [8, 352], strides = [1, 1]} : vector<8x358xf32> to vector<8x352xf32>
    %c32_29 = arith.constant 32 : index
    %c0_30 = arith.constant 0 : index
    %33 = vector.load %arg9[%c32_29, %c0_30] : memref<64x352xf32, #tpu.memory_space<vmem>>, vector<8x352xf32>
    tpu.vector_store %arg9[%c32_29, %c0_30], %32 {strides = array<i32>} : memref<64x352xf32, #tpu.memory_space<vmem>>, vector<8x352xf32>,
    %34 = vector.extract_strided_slice %13 {offsets = [0, 80], sizes = [8, 262], strides = [1, 1]} : vector<8x358xf32> to vector<8x262xf32>
    %c40 = arith.constant 40 : index
    %c0_31 = arith.constant 0 : index
    %35 = vector.load %arg8[%c40, %c0_31] : memref<64x262xf32, #tpu.memory_space<vmem>>, vector<8x262xf32>
    tpu.vector_store %arg8[%c40, %c0_31], %34 {strides = array<i32>} : memref<64x262xf32, #tpu.memory_space<vmem>>, vector<8x262xf32>,
    %36 = vector.extract_strided_slice %13 {offsets = [0, 5], sizes = [8, 352], strides = [1, 1]} : vector<8x358xf32> to vector<8x352xf32>
    %c40_32 = arith.constant 40 : index
    %c0_33 = arith.constant 0 : index
    %37 = vector.load %arg9[%c40_32, %c0_33] : memref<64x352xf32, #tpu.memory_space<vmem>>, vector<8x352xf32>
    tpu.vector_store %arg9[%c40_32, %c0_33], %36 {strides = array<i32>} : memref<64x352xf32, #tpu.memory_space<vmem>>, vector<8x352xf32>,
    %38 = vector.extract_strided_slice %13 {offsets = [0, 96], sizes = [8, 262], strides = [1, 1]} : vector<8x358xf32> to vector<8x262xf32>
    %c48 = arith.constant 48 : index
    %c0_34 = arith.constant 0 : index
    %39 = vector.load %arg8[%c48, %c0_34] : memref<64x262xf32, #tpu.memory_space<vmem>>, vector<8x262xf32>
    tpu.vector_store %arg8[%c48, %c0_34], %38 {strides = array<i32>} : memref<64x262xf32, #tpu.memory_space<vmem>>, vector<8x262xf32>,
    %40 = vector.extract_strided_slice %13 {offsets = [0, 6], sizes = [8, 352], strides = [1, 1]} : vector<8x358xf32> to vector<8x352xf32>
    %c48_35 = arith.constant 48 : index
    %c0_36 = arith.constant 0 : index
    %41 = vector.load %arg9[%c48_35, %c0_36] : memref<64x352xf32, #tpu.memory_space<vmem>>, vector<8x352xf32>
    tpu.vector_store %arg9[%c48_35, %c0_36], %40 {strides = array<i32>} : memref<64x352xf32, #tpu.memory_space<vmem>>, vector<8x352xf32>,
    %c0_37 = arith.constant 0 : index
    %c0_38 = arith.constant 0 : index
    %42 = vector.load %arg2[%c0_37, %c0_38] : memref<8x64xf32, #tpu.memory_space<vmem>>, vector<8x64xf32>
    %c0_39 = arith.constant 0 : index
    %c0_40 = arith.constant 0 : index
    %43 = vector.load %arg8[%c0_39, %c0_40] : memref<64x262xf32, #tpu.memory_space<vmem>>, vector<64x262xf32>
    %cst_41 = arith.constant dense<0.000000e+00> : vector<8x262xf32>
    %44 = tpu.matmul %42, %43, %cst_41 {dimension_numbers = #tpu.dot_dimension_numbers<[1], [0], [0], [1], [0, 0, 1, 1], [], []>} : vector<8x64xf32>, vector<64x262xf32>, vector<8x262xf32> -> vector<8x262xf32>
    %c0_42 = arith.constant 0 : index
    %c0_43 = arith.constant 0 : index
    %45 = vector.load %arg3[%c0_42, %c0_43] : memref<8x64xf32, #tpu.memory_space<vmem>>, vector<8x64xf32>
    %c0_44 = arith.constant 0 : index
    %c0_45 = arith.constant 0 : index
    %46 = vector.load %arg9[%c0_44, %c0_45] : memref<64x352xf32, #tpu.memory_space<vmem>>, vector<64x352xf32>
    %cst_46 = arith.constant dense<0.000000e+00> : vector<8x352xf32>
    %47 = tpu.matmul %45, %46, %cst_46 {dimension_numbers = #tpu.dot_dimension_numbers<[1], [0], [0], [1], [0, 0, 1, 1], [], []>} : vector<8x64xf32>, vector<64x352xf32>, vector<8x352xf32> -> vector<8x352xf32>
    %c0_47 = arith.constant 0 : index
    %c0_48 = arith.constant 0 : index
    %48 = vector.load %arg6[%c0_47, %c0_48] : memref<1x352xf32, #tpu.memory_space<vmem>>, vector<1x352xf32>
    %49 = vector.broadcast %48 : vector<1x352xf32> to vector<8x352xf32>
    %50 = arith.mulf %47, %49 : vector<8x352xf32>
    %51 = vector.extract_strided_slice %44 {offsets = [0, 0], sizes = [8, 256], strides = [1, 1]} : vector<8x262xf32> to vector<8x256xf32>
    %c0_49 = arith.constant 0 : index
    %c0_50 = arith.constant 0 : index
    %52 = vector.load %arg5[%c0_49, %c0_50] : memref<7x256xf32, #tpu.memory_space<vmem>>, vector<1x256xf32>
    %53 = vector.broadcast %52 : vector<1x256xf32> to vector<8x256xf32>
    %54 = arith.mulf %51, %53 : vector<8x256xf32>
    %c0_51 = arith.constant 0 : index
    %c0_52 = arith.constant 0 : index
    %55 = vector.load %arg10[%c0_51, %c0_52] : memref<120x256xf32, #tpu.memory_space<vmem>>, vector<8x256xf32>
    tpu.vector_store %arg10[%c0_51, %c0_52], %54 {strides = array<i32>} : memref<120x256xf32, #tpu.memory_space<vmem>>, vector<8x256xf32>,
    %56 = vector.extract_strided_slice %50 {offsets = [0, 0], sizes = [8, 256], strides = [1, 1]} : vector<8x352xf32> to vector<8x256xf32>
    %c56_53 = arith.constant 56 : index
    %c0_54 = arith.constant 0 : index
    %57 = vector.load %arg10[%c56_53, %c0_54] : memref<120x256xf32, #tpu.memory_space<vmem>>, vector<8x256xf32>
    tpu.vector_store %arg10[%c56_53, %c0_54], %56 {strides = array<i32>} : memref<120x256xf32, #tpu.memory_space<vmem>>, vector<8x256xf32>,
    %58 = vector.extract_strided_slice %44 {offsets = [0, 1], sizes = [8, 256], strides = [1, 1]} : vector<8x262xf32> to vector<8x256xf32>
    %c1 = arith.constant 1 : index
    %c0_55 = arith.constant 0 : index
    %59 = vector.load %arg5[%c1, %c0_55] : memref<7x256xf32, #tpu.memory_space<vmem>>, vector<1x256xf32>
    %60 = vector.broadcast %59 : vector<1x256xf32> to vector<8x256xf32>
    %61 = arith.mulf %58, %60 : vector<8x256xf32>
    %c8_56 = arith.constant 8 : index
    %c0_57 = arith.constant 0 : index
    %62 = vector.load %arg10[%c8_56, %c0_57] : memref<120x256xf32, #tpu.memory_space<vmem>>, vector<8x256xf32>
    tpu.vector_store %arg10[%c8_56, %c0_57], %61 {strides = array<i32>} : memref<120x256xf32, #tpu.memory_space<vmem>>, vector<8x256xf32>,
    %63 = vector.extract_strided_slice %50 {offsets = [0, 16], sizes = [8, 256], strides = [1, 1]} : vector<8x352xf32> to vector<8x256xf32>
    %c64 = arith.constant 64 : index
    %c0_58 = arith.constant 0 : index
    %64 = vector.load %arg10[%c64, %c0_58] : memref<120x256xf32, #tpu.memory_space<vmem>>, vector<8x256xf32>
    tpu.vector_store %arg10[%c64, %c0_58], %63 {strides = array<i32>} : memref<120x256xf32, #tpu.memory_space<vmem>>, vector<8x256xf32>,
    %65 = vector.extract_strided_slice %44 {offsets = [0, 2], sizes = [8, 256], strides = [1, 1]} : vector<8x262xf32> to vector<8x256xf32>
    %c2 = arith.constant 2 : index
    %c0_59 = arith.constant 0 : index
    %66 = vector.load %arg5[%c2, %c0_59] : memref<7x256xf32, #tpu.memory_space<vmem>>, vector<1x256xf32>
    %67 = vector.broadcast %66 : vector<1x256xf32> to vector<8x256xf32>
    %68 = arith.mulf %65, %67 : vector<8x256xf32>
    %c16_60 = arith.constant 16 : index
    %c0_61 = arith.constant 0 : index
    %69 = vector.load %arg10[%c16_60, %c0_61] : memref<120x256xf32, #tpu.memory_space<vmem>>, vector<8x256xf32>
    tpu.vector_store %arg10[%c16_60, %c0_61], %68 {strides = array<i32>} : memref<120x256xf32, #tpu.memory_space<vmem>>, vector<8x256xf32>,
    %70 = vector.extract_strided_slice %50 {offsets = [0, 32], sizes = [8, 256], strides = [1, 1]} : vector<8x352xf32> to vector<8x256xf32>
    %c72 = arith.constant 72 : index
    %c0_62 = arith.constant 0 : index
    %71 = vector.load %arg10[%c72, %c0_62] : memref<120x256xf32, #tpu.memory_space<vmem>>, vector<8x256xf32>
    tpu.vector_store %arg10[%c72, %c0_62], %70 {strides = array<i32>} : memref<120x256xf32, #tpu.memory_space<vmem>>, vector<8x256xf32>,
    %72 = vector.extract_strided_slice %44 {offsets = [0, 3], sizes = [8, 256], strides = [1, 1]} : vector<8x262xf32> to vector<8x256xf32>
    %c3 = arith.constant 3 : index
    %c0_63 = arith.constant 0 : index
    %73 = vector.load %arg5[%c3, %c0_63] : memref<7x256xf32, #tpu.memory_space<vmem>>, vector<1x256xf32>
    %74 = vector.broadcast %73 : vector<1x256xf32> to vector<8x256xf32>
    %75 = arith.mulf %72, %74 : vector<8x256xf32>
    %c24_64 = arith.constant 24 : index
    %c0_65 = arith.constant 0 : index
    %76 = vector.load %arg10[%c24_64, %c0_65] : memref<120x256xf32, #tpu.memory_space<vmem>>, vector<8x256xf32>
    tpu.vector_store %arg10[%c24_64, %c0_65], %75 {strides = array<i32>} : memref<120x256xf32, #tpu.memory_space<vmem>>, vector<8x256xf32>,
    %77 = vector.extract_strided_slice %50 {offsets = [0, 48], sizes = [8, 256], strides = [1, 1]} : vector<8x352xf32> to vector<8x256xf32>
    %c80 = arith.constant 80 : index
    %c0_66 = arith.constant 0 : index
    %78 = vector.load %arg10[%c80, %c0_66] : memref<120x256xf32, #tpu.memory_space<vmem>>, vector<8x256xf32>
    tpu.vector_store %arg10[%c80, %c0_66], %77 {strides = array<i32>} : memref<120x256xf32, #tpu.memory_space<vmem>>, vector<8x256xf32>,
    %79 = vector.extract_strided_slice %44 {offsets = [0, 4], sizes = [8, 256], strides = [1, 1]} : vector<8x262xf32> to vector<8x256xf32>
    %c4 = arith.constant 4 : index
    %c0_67 = arith.constant 0 : index
    %80 = vector.load %arg5[%c4, %c0_67] : memref<7x256xf32, #tpu.memory_space<vmem>>, vector<1x256xf32>
    %81 = vector.broadcast %80 : vector<1x256xf32> to vector<8x256xf32>
    %82 = arith.mulf %79, %81 : vector<8x256xf32>
    %c32_68 = arith.constant 32 : index
    %c0_69 = arith.constant 0 : index
    %83 = vector.load %arg10[%c32_68, %c0_69] : memref<120x256xf32, #tpu.memory_space<vmem>>, vector<8x256xf32>
    tpu.vector_store %arg10[%c32_68, %c0_69], %82 {strides = array<i32>} : memref<120x256xf32, #tpu.memory_space<vmem>>, vector<8x256xf32>,
    %84 = vector.extract_strided_slice %50 {offsets = [0, 64], sizes = [8, 256], strides = [1, 1]} : vector<8x352xf32> to vector<8x256xf32>
    %c88 = arith.constant 88 : index
    %c0_70 = arith.constant 0 : index
    %85 = vector.load %arg10[%c88, %c0_70] : memref<120x256xf32, #tpu.memory_space<vmem>>, vector<8x256xf32>
    tpu.vector_store %arg10[%c88, %c0_70], %84 {strides = array<i32>} : memref<120x256xf32, #tpu.memory_space<vmem>>, vector<8x256xf32>,
    %86 = vector.extract_strided_slice %44 {offsets = [0, 5], sizes = [8, 256], strides = [1, 1]} : vector<8x262xf32> to vector<8x256xf32>
    %c5 = arith.constant 5 : index
    %c0_71 = arith.constant 0 : index
    %87 = vector.load %arg5[%c5, %c0_71] : memref<7x256xf32, #tpu.memory_space<vmem>>, vector<1x256xf32>
    %88 = vector.broadcast %87 : vector<1x256xf32> to vector<8x256xf32>
    %89 = arith.mulf %86, %88 : vector<8x256xf32>
    %c40_72 = arith.constant 40 : index
    %c0_73 = arith.constant 0 : index
    %90 = vector.load %arg10[%c40_72, %c0_73] : memref<120x256xf32, #tpu.memory_space<vmem>>, vector<8x256xf32>
    tpu.vector_store %arg10[%c40_72, %c0_73], %89 {strides = array<i32>} : memref<120x256xf32, #tpu.memory_space<vmem>>, vector<8x256xf32>,
    %91 = vector.extract_strided_slice %50 {offsets = [0, 80], sizes = [8, 256], strides = [1, 1]} : vector<8x352xf32> to vector<8x256xf32>
    %c96 = arith.constant 96 : index
    %c0_74 = arith.constant 0 : index
    %92 = vector.load %arg10[%c96, %c0_74] : memref<120x256xf32, #tpu.memory_space<vmem>>, vector<8x256xf32>
    tpu.vector_store %arg10[%c96, %c0_74], %91 {strides = array<i32>} : memref<120x256xf32, #tpu.memory_space<vmem>>, vector<8x256xf32>,
    %93 = vector.extract_strided_slice %44 {offsets = [0, 6], sizes = [8, 256], strides = [1, 1]} : vector<8x262xf32> to vector<8x256xf32>
    %c6 = arith.constant 6 : index
    %c0_75 = arith.constant 0 : index
    %94 = vector.load %arg5[%c6, %c0_75] : memref<7x256xf32, #tpu.memory_space<vmem>>, vector<1x256xf32>
    %95 = vector.broadcast %94 : vector<1x256xf32> to vector<8x256xf32>
    %96 = arith.mulf %93, %95 : vector<8x256xf32>
    %c48_76 = arith.constant 48 : index
    %c0_77 = arith.constant 0 : index
    %97 = vector.load %arg10[%c48_76, %c0_77] : memref<120x256xf32, #tpu.memory_space<vmem>>, vector<8x256xf32>
    tpu.vector_store %arg10[%c48_76, %c0_77], %96 {strides = array<i32>} : memref<120x256xf32, #tpu.memory_space<vmem>>, vector<8x256xf32>,
    %98 = vector.extract_strided_slice %50 {offsets = [0, 96], sizes = [8, 256], strides = [1, 1]} : vector<8x352xf32> to vector<8x256xf32>
    %c104 = arith.constant 104 : index
    %c0_78 = arith.constant 0 : index
    %99 = vector.load %arg10[%c104, %c0_78] : memref<120x256xf32, #tpu.memory_space<vmem>>, vector<8x256xf32>
    tpu.vector_store %arg10[%c104, %c0_78], %98 {strides = array<i32>} : memref<120x256xf32, #tpu.memory_space<vmem>>, vector<8x256xf32>,
    %c0_79 = arith.constant 0 : index
    %c0_80 = arith.constant 0 : index
    %100 = vector.load %arg4[%c0_79, %c0_80] : memref<8x120xf32, #tpu.memory_space<vmem>>, vector<8x120xf32>
    %c0_81 = arith.constant 0 : index
    %c0_82 = arith.constant 0 : index
    %101 = vector.load %arg10[%c0_81, %c0_82] : memref<120x256xf32, #tpu.memory_space<vmem>>, vector<120x256xf32>
    %cst_83 = arith.constant dense<0.000000e+00> : vector<8x256xf32>
    %102 = tpu.matmul %100, %101, %cst_83 {dimension_numbers = #tpu.dot_dimension_numbers<[1], [0], [0], [1], [0, 0, 1, 1], [], []>} : vector<8x120xf32>, vector<120x256xf32>, vector<8x256xf32> -> vector<8x256xf32>
    %c0_84 = arith.constant 0 : index
    %c0_85 = arith.constant 0 : index
    %c0_86 = arith.constant 0 : index
    %103 = vector.load %arg7[%c0_84, %c0_85, %c0_86] : memref<1x8x256xf32, #tpu.memory_space<vmem>>, vector<1x8x256xf32>
    %104 = vector.shape_cast %103 : vector<1x8x256xf32> to vector<8x256xf32>
    %105 = vector.shape_cast %102 : vector<8x256xf32> to vector<1x8x256xf32>
    tpu.vector_store %arg7[%c0_84, %c0_85, %c0_86], %105 {strides = array<i32>} : memref<1x8x256xf32, #tpu.memory_space<vmem>>, vector<1x8x256xf32>,
    return
  }
  func.func @transform_0(%arg0: i32) -> (i32, i32, i32) {
    %c0_i32 = arith.constant 0 : i32
    %c0_i32_0 = arith.constant 0 : i32
    %c0_i32_1 = arith.constant 0 : i32
    return %arg0, %c0_i32, %c0_i32_0 : i32, i32, i32
  }
  func.func @transform_1(%arg0: i32) -> (i32, i32) {
    %c0_i32 = arith.constant 0 : i32
    %c0_i32_0 = arith.constant 0 : i32
    %c0_i32_1 = arith.constant 0 : i32
    return %c0_i32, %c0_i32_0 : i32, i32
  }
  func.func @transform_2(%arg0: i32) -> (i32, i32) {
    %c0_i32 = arith.constant 0 : i32
    %c0_i32_0 = arith.constant 0 : i32
    %c0_i32_1 = arith.constant 0 : i32
    return %c0_i32, %c0_i32_0 : i32, i32
  }
  func.func @transform_3(%arg0: i32) -> (i32, i32) {
    %c0_i32 = arith.constant 0 : i32
    %c0_i32_0 = arith.constant 0 : i32
    %c0_i32_1 = arith.constant 0 : i32
    return %c0_i32, %c0_i32_0 : i32, i32
  }
  func.func @transform_4(%arg0: i32) -> (i32, i32) {
    %c0_i32 = arith.constant 0 : i32
    %c0_i32_0 = arith.constant 0 : i32
    %c0_i32_1 = arith.constant 0 : i32
    return %c0_i32, %c0_i32_0 : i32, i32
  }
  func.func @transform_5(%arg0: i32) -> (i32, i32) {
    %c0_i32 = arith.constant 0 : i32
    %c0_i32_0 = arith.constant 0 : i32
    %c0_i32_1 = arith.constant 0 : i32
    return %c0_i32, %c0_i32_0 : i32, i32
  }
  func.func @transform_6(%arg0: i32) -> (i32, i32, i32) {
    %c0_i32 = arith.constant 0 : i32
    %c0_i32_0 = arith.constant 0 : i32
    %c0_i32_1 = arith.constant 0 : i32
    return %arg0, %c0_i32, %c0_i32_0 : i32, i32, i32
  }
}

</mosaic_0001>

<llo_original>
// kernel: tpu_custom_call.1
$region0: #{tpu_custom_call.1}
  #allocation0 [shape = 'u32[]', space=smem, size = 0x4, offset = 0x4, fixed_abs, tag = 'smem constant byte address 0x4 - core index']
  #allocation1 [shape = 'u32[144,128]{1,0:T(1,128)}', space=vmem, size = 0x12000, scoped, tag = 'internal scratch']
  #allocation2 [shape = 'f32[64,262]{1,0:T(8,128)}', space=vmem, size = 0x18000, scoped, tag = 'scratch operand']
  #allocation3 [shape = 'f32[64,352]{1,0:T(8,128)}', space=vmem, size = 0x18000, scoped, tag = 'scratch operand']
  #allocation4 [shape = 'f32[120,256]{1,0:T(8,128)}', space=vmem, size = 0x1e000, scoped, tag = 'scratch operand']
  %s0 = inlined_call_operand.hbm [shape: f32[2,8,358], index: 0, kind: input, shape index: {}]
  %s1 = inlined_call_operand.hbm [shape: f32[8,64], index: 1, kind: input, shape index: {}]
  %s2 = inlined_call_operand.hbm [shape: f32[8,64], index: 2, kind: input, shape index: {}]
  %s3 = inlined_call_operand.vmem [shape: f32[8,120], index: 3, kind: input, shape index: {}]
  %s4 = inlined_call_operand.hbm [shape: f32[7,256], index: 4, kind: input, shape index: {}]
  %s5 = inlined_call_operand.vmem [shape: f32[1,352], index: 5, kind: input, shape index: {}]
  %s6 = inlined_call_operand.hbm [shape: f32[2,8,256], index: 6, kind: output, shape index: {}]
  %s7 = sld [smem:[#allocation0]]
  $region73: #{tpu_custom_call.1} parent=0
    _
  %s9 = ssub.s32 1, %s7
  %s10 = scalar_select 0, %s9, %s7
  $region1: #{tpu_custom_call.1} parent=0
    #allocation5 [shape = 'u8[24576]{0}', space=vmem, size = 0x6000, scoped, tag = 'input window, operand 0']
    #allocation6 [shape = 's32[2]{0}', space=sflag, size = 0x8, scoped, tag = 'scoped memory for tpu_custom_call.1']
    #allocation7 [shape = 's32[2]{0}', space=sflag, size = 0x8, scoped, tag = 'scoped memory for tpu_custom_call.1']
    #allocation8 [shape = 'u8[4096]{0}', space=vmem, size = 0x1000, scoped, tag = 'input window, operand 1, single buffered']
    #allocation9 [shape = 's32[1]{0}', space=sflag, size = 0x4, scoped, tag = 'scoped memory for tpu_custom_call.1']
    #allocation10 [shape = 'u8[4096]{0}', space=vmem, size = 0x1000, scoped, tag = 'input window, operand 2, single buffered']
    #allocation11 [shape = 'u8[8192]{0}', space=vmem, size = 0x2000, scoped, tag = 'input window, operand 4, single buffered']
    #allocation12 [shape = 's32[1]{0}', space=sflag, size = 0x4, scoped, tag = 'scoped memory for tpu_custom_call.1']
    #allocation13 [shape = 'u8[16384]{0}', space=vmem, size = 0x4000, scoped, tag = 'output window, operand 0']
    %11 = vsyncpa [#allocation6], 0
    %s12 = scalar_lea.sflag [#allocation6], 1
    %13 = vsyncpa %s12, 0
    %14 = vsyncpa [#allocation9], 0
    %15 = vsyncpa [#allocation12], 0
    %16 = vsyncpa [#allocation7], 0
    %s17 = scalar_lea.sflag [#allocation7], 1
    %18 = vsyncpa %s17, 0
    loop: start=0, step=1, limit=4
    $region2: #{tpu_custom_call.1} parent=1 // loop_pre_header
      _
    $region3: #{tpu_custom_call.1} parent=1 // loop_header
      %s20 = sphi 0, %s24
      %p21 = scmp.ge.s32.totalorder %s20, 4
      %s30 = sphi 0, %s32
      %s33 = sphi 0, %s30
      %s34 = sphi 0, %s33
      %s50 = sphi 0, %s34
      %s54 = sphi 0, %s54
      %s56 = sphi 0, %s54
      %s57 = sphi 0, %s56
      %s71 = sphi 0, %s57
      %s75 = sphi 0, %s75
      %s77 = sphi 0, %s75
      %s78 = sphi 0, %s77
      %s92 = sphi 0, %s78
      %s96 = sphi 0, %s96
      %s98 = sphi 0, %s96
      %s99 = sphi 0, %s98
      %s113 = sphi 0, %s99
      %s117 = sphi 0, %s117
      %s119 = sphi 0, %s117
      %s120 = sphi 0, %s119
      %s134 = sphi 0, %s120
      %s138 = sphi 0, %s138
      %s140 = sphi 0, %s138
      %s141 = sphi 0, %s140
      %s155 = sphi 0, %s141
      %s161 = sphi 0, %s163
      %s164 = sphi 0, %s161
      %s165 = sphi 0, %s164
      %s181 = sphi 0, %s165
    $region4: #{tpu_custom_call.1} parent=1 // loop_header_branch
      %23 = sbr.rel (%p21) target = $region8
    $region5: #{tpu_custom_call.1} parent=1 // loop_body
      %s25 = ssub.s32 %s20, 1
      %s26 = ssub.s32 %s20, 2
      %s27 = sadd.s32 %s20, 1
      %s28 = ssub.s32 %s20, %s27
      %p29 = scmp.eq.s32.totalorder %s28, 0
      %s31 = sadd.s32 %s30, 1
      %s32 = scalar_select %p29, %s30, %s31
      %p35 = pneg %p29
      %p36 = scmp.eq.s32.totalorder %s20, 1
      %p37 = por %p35, %p36
      %p38 = scmp.ne.s32.totalorder %s30, %s33
      %p39 = scmp.eq.s32.totalorder %s20, 0
      %p40 = por %p38, %p39
      %p41 = scmp.ne.s32.totalorder %s30, %s33
      %p42 = scmp.eq.s32.totalorder %s25, 1
      %p43 = por %p41, %p42
      %p44 = scmp.ne.s32.totalorder %s33, %s34
      %p45 = scmp.eq.s32.totalorder %s25, 0
      %p46 = por %p44, %p45
      %p47 = scmp.ne.s32.totalorder %s33, %s34
      %p48 = scmp.eq.s32.totalorder %s26, 1
      %p49 = por %p47, %p48
      %p51 = scmp.ne.s32.totalorder %s34, %s50
      %p52 = scmp.eq.s32.totalorder %s26, 0
      %p53 = por %p51, %p52
      %s55 = sadd.s32 %s54, 1
      %p58 = scmp.eq.s32.totalorder %s20, 1
      %p59 = scmp.ne.s32.totalorder %s54, %s56
      %p60 = scmp.eq.s32.totalorder %s20, 0
      %p61 = por %p59, %p60
      %p62 = scmp.ne.s32.totalorder %s54, %s56
      %p63 = scmp.eq.s32.totalorder %s25, 1
      %p64 = por %p62, %p63
      %p65 = scmp.ne.s32.totalorder %s56, %s57
      %p66 = scmp.eq.s32.totalorder %s25, 0
      %p67 = por %p65, %p66
      %p68 = scmp.ne.s32.totalorder %s56, %s57
      %p69 = scmp.eq.s32.totalorder %s26, 1
      %p70 = por %p68, %p69
      %p72 = scmp.ne.s32.totalorder %s57, %s71
      %p73 = scmp.eq.s32.totalorder %s26, 0
      %p74 = por %p72, %p73
      %s76 = sadd.s32 %s75, 1
      %p79 = scmp.eq.s32.totalorder %s20, 1
      %p80 = scmp.ne.s32.totalorder %s75, %s77
      %p81 = scmp.eq.s32.totalorder %s20, 0
      %p82 = por %p80, %p81
      %p83 = scmp.ne.s32.totalorder %s75, %s77
      %p84 = scmp.eq.s32.totalorder %s25, 1
      %p85 = por %p83, %p84
      %p86 = scmp.ne.s32.totalorder %s77, %s78
      %p87 = scmp.eq.s32.totalorder %s25, 0
      %p88 = por %p86, %p87
      %p89 = scmp.ne.s32.totalorder %s77, %s78
      %p90 = scmp.eq.s32.totalorder %s26, 1
      %p91 = por %p89, %p90
      %p93 = scmp.ne.s32.totalorder %s78, %s92
      %p94 = scmp.eq.s32.totalorder %s26, 0
      %p95 = por %p93, %p94
      %s97 = sadd.s32 %s96, 1
      %p100 = scmp.eq.s32.totalorder %s20, 1
      %p101 = scmp.ne.s32.totalorder %s96, %s98
      %p102 = scmp.eq.s32.totalorder %s20, 0
      %p103 = por %p101, %p102
      %p104 = scmp.ne.s32.totalorder %s96, %s98
      %p105 = scmp.eq.s32.totalorder %s25, 1
      %p106 = por %p104, %p105
      %p107 = scmp.ne.s32.totalorder %s98, %s99
      %p108 = scmp.eq.s32.totalorder %s25, 0
      %p109 = por %p107, %p108
      %p110 = scmp.ne.s32.totalorder %s98, %s99
      %p111 = scmp.eq.s32.totalorder %s26, 1
      %p112 = por %p110, %p111
      %p114 = scmp.ne.s32.totalorder %s99, %s113
      %p115 = scmp.eq.s32.totalorder %s26, 0
      %p116 = por %p114, %p115
      %s118 = sadd.s32 %s117, 1
      %p121 = scmp.eq.s32.totalorder %s20, 1
      %p122 = scmp.ne.s32.totalorder %s117, %s119
      %p123 = scmp.eq.s32.totalorder %s20, 0
      %p124 = por %p122, %p123
      %p125 = scmp.ne.s32.totalorder %s117, %s119
      %p126 = scmp.eq.s32.totalorder %s25, 1
      %p127 = por %p125, %p126
      %p128 = scmp.ne.s32.totalorder %s119, %s120
      %p129 = scmp.eq.s32.totalorder %s25, 0
      %p130 = por %p128, %p129
      %p131 = scmp.ne.s32.totalorder %s119, %s120
      %p132 = scmp.eq.s32.totalorder %s26, 1
      %p133 = por %p131, %p132
      %p135 = scmp.ne.s32.totalorder %s120, %s134
      %p136 = scmp.eq.s32.totalorder %s26, 0
      %p137 = por %p135, %p136
      %s139 = sadd.s32 %s138, 1
      %p142 = scmp.eq.s32.totalorder %s20, 1
      %p143 = scmp.ne.s32.totalorder %s138, %s140
      %p144 = scmp.eq.s32.totalorder %s20, 0
      %p145 = por %p143, %p144
      %p146 = scmp.ne.s32.totalorder %s138, %s140
      %p147 = scmp.eq.s32.totalorder %s25, 1
      %p148 = por %p146, %p147
      %p149 = scmp.ne.s32.totalorder %s140, %s141
      %p150 = scmp.eq.s32.totalorder %s25, 0
      %p151 = por %p149, %p150
      %p152 = scmp.ne.s32.totalorder %s140, %s141
      %p153 = scmp.eq.s32.totalorder %s26, 1
      %p154 = por %p152, %p153
      %p156 = scmp.ne.s32.totalorder %s141, %s155
      %p157 = scmp.eq.s32.totalorder %s26, 0
      %p158 = por %p156, %p157
      %s159 = ssub.s32 %s20, %s27
      %p160 = scmp.eq.s32.totalorder %s159, 0
      %s162 = sadd.s32 %s161, 1
      %s163 = scalar_select %p160, %s161, %s162
      %p166 = pneg %p160
      %p167 = scmp.eq.s32.totalorder %s20, 1
      %p168 = por %p166, %p167
      %p169 = scmp.ne.s32.totalorder %s161, %s164
      %p170 = scmp.eq.s32.totalorder %s20, 0
      %p171 = por %p169, %p170
      %p172 = scmp.ne.s32.totalorder %s161, %s164
      %p173 = scmp.eq.s32.totalorder %s25, 1
      %p174 = por %p172, %p173
      %p175 = scmp.ne.s32.totalorder %s164, %s165
      %p176 = scmp.eq.s32.totalorder %s25, 0
      %p177 = por %p175, %p176
      %p178 = scmp.ne.s32.totalorder %s164, %s165
      %p179 = scmp.eq.s32.totalorder %s26, 1
      %p180 = por %p178, %p179
      %p182 = scmp.ne.s32.totalorder %s165, %s181
      %p183 = scmp.eq.s32.totalorder %s26, 0
      %p184 = por %p182, %p183
      %p185 = scmp.le.s32.totalorder 1, %s20
      %p186 = scmp.lt.s32.totalorder %s20, 3
      %p187 = pnand %p185, %p186
      %p188 = pneg %p187
      // Predicated region
      $region9: #{tpu_custom_call.1} parent=5 // pred_check
        _
      $region10: #{tpu_custom_call.1} parent=5 // pred_check_branch
        %190 = sbr.rel (%p187) target = $region12
      $region11: #{tpu_custom_call.1} parent=5 // pred_region
        %s191 = ssub.s32 %s20, 1
        // Predicated region
        $region13: #{tpu_custom_call.1} parent=11 // pred_check
          %p192 = pneg %p67
        $region14: #{tpu_custom_call.1} parent=11 // pred_check_branch
          %194 = sbr.rel (%p192) target = $region16
        $region15: #{tpu_custom_call.1} parent=11 // pred_region
          %s196 = ssub.s32 128, 128
          %197 = vsyncadd [#allocation9], %s196
          %s199 = sshll.u32 [#allocation8], 4
          %s200 = int_to_ptr.vmem [resolvable:$true] %s199
          %202 = dma.hbm_to_vmem [thread:$0]  %s1, 128, %s200, [#allocation9]
        $region16: #{tpu_custom_call.1} parent=11 // pred_fallthru
          _
        // Predicated region
        $region17: #{tpu_custom_call.1} parent=11 // pred_check
          %p203 = pneg %p88
        $region18: #{tpu_custom_call.1} parent=11 // pred_check_branch
          %205 = sbr.rel (%p203) target = $region20
        $region19: #{tpu_custom_call.1} parent=11 // pred_region
          %s207 = ssub.s32 128, 128
          %208 = vsyncadd [#allocation9], %s207
          %s210 = sshll.u32 [#allocation10], 4
          %s211 = int_to_ptr.vmem [resolvable:$true] %s210
          %213 = dma.hbm_to_vmem [thread:$0]  %s2, 128, %s211, [#allocation9]
        $region20: #{tpu_custom_call.1} parent=11 // pred_fallthru
          _
        // Predicated region
        $region21: #{tpu_custom_call.1} parent=11 // pred_check
          %p214 = pneg %p109
        $region22: #{tpu_custom_call.1} parent=11 // pred_check_branch
          %216 = sbr.rel (%p214) target = $region24
        $region23: #{tpu_custom_call.1} parent=11 // pred_region
          _
        $region24: #{tpu_custom_call.1} parent=11 // pred_fallthru
          _
        // Predicated region
        $region25: #{tpu_custom_call.1} parent=11 // pred_check
          %p217 = pneg %p130
        $region26: #{tpu_custom_call.1} parent=11 // pred_check_branch
          %219 = sbr.rel (%p217) target = $region28
        $region27: #{tpu_custom_call.1} parent=11 // pred_region
          %s221 = ssub.s32 256, 256
          %222 = vsyncadd [#allocation12], %s221
          %s224 = sshll.u32 [#allocation11], 4
          %s225 = int_to_ptr.vmem [resolvable:$true] %s224
          %227 = dma.hbm_to_vmem [thread:$0]  %s4, 256, %s225, [#allocation12]
        $region28: #{tpu_custom_call.1} parent=11 // pred_fallthru
          _
        // Predicated region
        $region29: #{tpu_custom_call.1} parent=11 // pred_check
          %p228 = pneg %p151
        $region30: #{tpu_custom_call.1} parent=11 // pred_check_branch
          %230 = sbr.rel (%p228) target = $region32
        $region31: #{tpu_custom_call.1} parent=11 // pred_region
          _
        $region32: #{tpu_custom_call.1} parent=11 // pred_fallthru
          _
      $region12: #{tpu_custom_call.1} parent=5 // pred_fallthru
        _
      %p231 = scmp.lt.s32.totalorder %s20, 2
      // Predicated region
      $region33: #{tpu_custom_call.1} parent=5 // pred_check
        %p232 = pneg %p231
      $region34: #{tpu_custom_call.1} parent=5 // pred_check_branch
        %234 = sbr.rel (%p232) target = $region36
      $region35: #{tpu_custom_call.1} parent=5 // pred_region
        // Predicated region
        $region37: #{tpu_custom_call.1} parent=35 // pred_check
          %p235 = pneg %p40
        $region38: #{tpu_custom_call.1} parent=35 // pred_check_branch
          %237 = sbr.rel (%p235) target = $region40
        $region39: #{tpu_custom_call.1} parent=35 // pred_region
          %s238 = sand.u32 %s30, 1
          %s239 = scalar_lea.sflag [#allocation6], %s238
          %s240 = sand.u32 %s30, 1
          %s241 = smul.addr %s240, 24
          %s242 = scalar_lea.vmem [#allocation5], %s241
          %s244 = ssub.s32 384, 384
          %245 = vsyncadd %s239, %s244
          %s246 = smul.addr %s20, 3
          %s247 = smul.addr %s246, 128
          %s248 = scalar_lea.hbm %s0, %s247
          %s250 = sshll.u32 %s242, 4
          %s251 = int_to_ptr.vmem [resolvable:$true] %s250
          %253 = dma.hbm_to_vmem [thread:$0]  %s248, 384, %s251, %s239
        $region40: #{tpu_custom_call.1} parent=35 // pred_fallthru
          _
      $region36: #{tpu_custom_call.1} parent=5 // pred_fallthru
        _
      %p254 = scmp.le.s32.totalorder 1, %s20
      %p255 = scmp.lt.s32.totalorder %s20, 3
      %p256 = pnand %p254, %p255
      %p257 = pneg %p256
      // Predicated region
      $region41: #{tpu_custom_call.1} parent=5 // pred_check
        _
      $region42: #{tpu_custom_call.1} parent=5 // pred_check_branch
        %259 = sbr.rel (%p256) target = $region44
      $region43: #{tpu_custom_call.1} parent=5 // pred_region
        %s260 = ssub.s32 %s20, 1
        %s261 = sand.u32 %s33, 1
        %s262 = scalar_lea.sflag [#allocation6], %s261
        %s263 = sand.u32 %s33, 1
        %s264 = smul.addr %s263, 24
        %s265 = scalar_lea.vmem [#allocation5], %s264
        // Predicated region
        $region45: #{tpu_custom_call.1} parent=43 // pred_check
          %p266 = pneg %p46
        $region46: #{tpu_custom_call.1} parent=43 // pred_check_branch
          %268 = sbr.rel (%p266) target = $region48
        $region47: #{tpu_custom_call.1} parent=43 // pred_region
          %269 = dma.done %s262, 384
        $region48: #{tpu_custom_call.1} parent=43 // pred_fallthru
          _
        // Predicated region
        $region49: #{tpu_custom_call.1} parent=43 // pred_check
          %p270 = pneg %p67
        $region50: #{tpu_custom_call.1} parent=43 // pred_check_branch
          %272 = sbr.rel (%p270) target = $region52
        $region51: #{tpu_custom_call.1} parent=43 // pred_region
          %273 = dma.done [#allocation9], 128
        $region52: #{tpu_custom_call.1} parent=43 // pred_fallthru
          _
        // Predicated region
        $region53: #{tpu_custom_call.1} parent=43 // pred_check
          %p274 = pneg %p88
        $region54: #{tpu_custom_call.1} parent=43 // pred_check_branch
          %276 = sbr.rel (%p274) target = $region56
        $region55: #{tpu_custom_call.1} parent=43 // pred_region
          %277 = dma.done [#allocation9], 128
        $region56: #{tpu_custom_call.1} parent=43 // pred_fallthru
          _
        // Predicated region
        $region57: #{tpu_custom_call.1} parent=43 // pred_check
          %p278 = pneg %p130
        $region58: #{tpu_custom_call.1} parent=43 // pred_check_branch
          %280 = sbr.rel (%p278) target = $region60
        $region59: #{tpu_custom_call.1} parent=43 // pred_region
          %281 = dma.done [#allocation12], 256
        $region60: #{tpu_custom_call.1} parent=43 // pred_fallthru
          _
        %s282 = sand.u32 %s33, 1
        %s283 = scalar_lea.sflag [#allocation6], %s282
        %s284 = sand.u32 %s33, 1
        %s285 = smul.addr %s284, 24
        %s286 = scalar_lea.vmem [#allocation5], %s285
        %p287 = pneg %p46
        %p288 = pneg %p43
        %p289 = pneg %p67
        %p290 = pneg %p64
        %p291 = pneg %p88
        %p292 = pneg %p85
        %p293 = pneg %p109
        %p294 = pneg %p106
        %p295 = pneg %p130
        %p296 = pneg %p127
        %p297 = pneg %p151
        %p298 = pneg %p148
        %p299 = pneg %p177
        %p300 = pneg %p174
        %s301 = sand.u32 %s164, 1
        %s302 = scalar_lea.sflag [#allocation7], %s301
        %s303 = sand.u32 %s164, 1
        %s304 = smul.addr %s303, 16
        %s305 = scalar_lea.vmem [#allocation13], %s304
        %v306 = vlaneseq
        %vm307 = vcmp.ge.s32.totalorder %v306, 0
        %vm308 = vcmp.lt.s32.totalorder %v306, 262
        %vm309 = vmand %vm307, %vm308
        %s310 = scalar_lea.vmem [#allocation2], 168
        %311 = vst.msk [vmem:[%s310] ss:$8 sm:$0x7] %vm309, 1.0
        %312 = vst.msk [vmem:[%s310] ss:$8 sm:$0x0] %vm309, 1.0
        %vm313 = vcmp.lt.s32.totalorder %v306, 352
        %vm314 = vmand %vm307, %vm313
        %s315 = scalar_lea.vmem [#allocation3], 168
        %316 = vst.msk [vmem:[%s315] ss:$8 sm:$0x7] %vm314, 1.0
        %317 = vst.msk [vmem:[%s315] ss:$8 sm:$0x0] %vm314, 1.0
        %vm318 = vcmp.lt.s32.totalorder %v306, 256
        %vm319 = vmand %vm307, %vm318
        %s320 = scalar_lea.vmem [#allocation4], 224
        %321 = vst.msk [vmem:[%s320] ss:$8 sm:$0x3] %vm319, 1.0
        %322 = vst.msk [vmem:[%s320] ss:$8 sm:$0x0] %vm319, 1.0
        %323 = vst [vmem:[#allocation2 + $0xa8] sm:$0xfe] 0.0
        %324 = vst [vmem:[#allocation2 + $0xb0] sm:$0xfe] 0.0
        %vm325 = vcmask 48129
        %326 = vst.msk [vmem:[#allocation2 + $0xb8] sm:$0xfe] %vm325, 0.0
        %327 = vst [vmem:[#allocation3 + $0xa8] sm:$0xfe] 0.0
        %328 = vst [vmem:[#allocation3 + $0xb0] sm:$0xfe] 0.0
        %vm329 = vcmask 785409
        %330 = vst.msk [vmem:[#allocation3 + $0xb8] sm:$0xfe] %vm329, 0.0
        %331 = vst [vmem:[#allocation4 + $0xe0] sm:$0xfe] 0.0
        %332 = vst [vmem:[#allocation4 + $0xe8] sm:$0xfe] 0.0
        %v333 = vld [vmem:[%s265] sm:$0xff]
        %v334 = vld [vmem:[%s265 + $0x8] sm:$0xff]
        %v335 = vld [vmem:[%s265 + $0x10] sm:$0xff]
        %336 = vst [vmem:[#allocation2] sm:$0xff] %v333
        %337 = vst [vmem:[#allocation2 + $0x8] sm:$0xff] %v334
        %vm338 = vcmask 48128
        %339 = vst.msk [vmem:[#allocation2 + $0x10] sm:$0xff] %vm338, %v335
        %340 = vst [vmem:[#allocation3] sm:$0xff] %v333
        %341 = vst [vmem:[#allocation3 + $0x8] sm:$0xff] %v334
        %vm342 = vcmask 785408
        %343 = vst.msk [vmem:[#allocation3 + $0x10] sm:$0xff] %vm342, %v335
        %347 = vrot.lane.b32.xlu0 %v333, 112
        %v348 = vpop.permute.xlu0 %347
        %349 = vrot.lane.b32.xlu0 %v334, 112
        %v350 = vpop.permute.xlu0 %349
        %351 = vrot.lane.b32.xlu0 %v335, 112
        %v352 = vpop.permute.xlu0 %351
        %vm353 = vcmask 916480
        %v354 = vsel %vm353, %v348, %v350
        %v355 = vsel %vm353, %v350, %v352
        %359 = vst [vmem:[#allocation2 + $0x18] sm:$0xff] %v354
        %360 = vst [vmem:[#allocation2 + $0x20] sm:$0xff] %v355
        %361 = vst.msk [vmem:[#allocation2 + $0x28] sm:$0xff] %vm338, %v352
        %362 = vrot.lane.b32.xlu0 %v333, 127
        %v363 = vpop.permute.xlu0 %362
        %364 = vrot.lane.b32.xlu0 %v334, 127
        %v365 = vpop.permute.xlu0 %364
        %366 = vrot.lane.b32.xlu0 %v335, 127
        %v367 = vpop.permute.xlu0 %366
        %vm368 = vcmask 1039360
        %v369 = vsel %vm368, %v363, %v365
        %v370 = vsel %vm368, %v365, %v367
        %374 = vst [vmem:[#allocation3 + $0x18] sm:$0xff] %v369
        %375 = vst [vmem:[#allocation3 + $0x20] sm:$0xff] %v370
        %376 = vst.msk [vmem:[#allocation3 + $0x28] sm:$0xff] %vm342, %v367
        %377 = vrot.lane.b32.xlu0 %v333, 96
        %v378 = vpop.permute.xlu0 %377
        %379 = vrot.lane.b32.xlu0 %v334, 96
        %v380 = vpop.permute.xlu0 %379
        %381 = vrot.lane.b32.xlu0 %v335, 96
        %v382 = vpop.permute.xlu0 %381
        %v383 = vsel %vm342, %v378, %v380
        %v384 = vsel %vm342, %v380, %v382
        %388 = vst [vmem:[#allocation2 + $0x30] sm:$0xff] %v383
        %389 = vst [vmem:[#allocation2 + $0x38] sm:$0xff] %v384
        %390 = vst.msk [vmem:[#allocation2 + $0x40] sm:$0xff] %vm338, %v382
        %391 = vrot.lane.b32.xlu0 %v333, 126
        %v392 = vpop.permute.xlu0 %391
        %393 = vrot.lane.b32.xlu0 %v334, 126
        %v394 = vpop.permute.xlu0 %393
        %395 = vrot.lane.b32.xlu0 %v335, 126
        %v396 = vpop.permute.xlu0 %395
        %vm397 = vcmask 1031168
        %v398 = vsel %vm397, %v392, %v394
        %v399 = vsel %vm397, %v394, %v396
        %403 = vst [vmem:[#allocation3 + $0x30] sm:$0xff] %v398
        %404 = vst [vmem:[#allocation3 + $0x38] sm:$0xff] %v399
        %405 = vst.msk [vmem:[#allocation3 + $0x40] sm:$0xff] %vm342, %v396
        %406 = vrot.lane.b32.xlu0 %v333, 80
        %v407 = vpop.permute.xlu0 %406
        %408 = vrot.lane.b32.xlu0 %v334, 80
        %v409 = vpop.permute.xlu0 %408
        %410 = vrot.lane.b32.xlu0 %v335, 80
        %v411 = vpop.permute.xlu0 %410
        %vm412 = vcmask 654336
        %v413 = vsel %vm412, %v407, %v409
        %v414 = vsel %vm412, %v409, %v411
        %418 = vst [vmem:[#allocation2 + $0x48] sm:$0xff] %v413
        %419 = vst [vmem:[#allocation2 + $0x50] sm:$0xff] %v414
        %420 = vst.msk [vmem:[#allocation2 + $0x58] sm:$0xff] %vm338, %v411
        %421 = vrot.lane.b32.xlu0 %v333, 125
        %v422 = vpop.permute.xlu0 %421
        %423 = vrot.lane.b32.xlu0 %v334, 125
        %v424 = vpop.permute.xlu0 %423
        %425 = vrot.lane.b32.xlu0 %v335, 125
        %v426 = vpop.permute.xlu0 %425
        %vm427 = vcmask 1022976
        %v428 = vsel %vm427, %v422, %v424
        %v429 = vsel %vm427, %v424, %v426
        %433 = vst [vmem:[#allocation3 + $0x48] sm:$0xff] %v428
        %434 = vst [vmem:[#allocation3 + $0x50] sm:$0xff] %v429
        %435 = vst.msk [vmem:[#allocation3 + $0x58] sm:$0xff] %vm342, %v426
        %436 = vrot.lane.b32.xlu0 %v333, 64
        %v437 = vpop.permute.xlu0 %436
        %438 = vrot.lane.b32.xlu0 %v334, 64
        %v439 = vpop.permute.xlu0 %438
        %440 = vrot.lane.b32.xlu0 %v335, 64
        %v441 = vpop.permute.xlu0 %440
        %vm442 = vcmask 523264
        %v443 = vsel %vm442, %v437, %v439
        %v444 = vsel %vm442, %v439, %v441
        %448 = vst [vmem:[#allocation2 + $0x60] sm:$0xff] %v443
        %449 = vst [vmem:[#allocation2 + $0x68] sm:$0xff] %v444
        %450 = vst.msk [vmem:[#allocation2 + $0x70] sm:$0xff] %vm338, %v441
        %451 = vrot.lane.b32.xlu0 %v333, 124
        %v452 = vpop.permute.xlu0 %451
        %453 = vrot.lane.b32.xlu0 %v334, 124
        %v454 = vpop.permute.xlu0 %453
        %455 = vrot.lane.b32.xlu0 %v335, 124
        %v456 = vpop.permute.xlu0 %455
        %vm457 = vcmask 1014784
        %v458 = vsel %vm457, %v452, %v454
        %v459 = vsel %vm457, %v454, %v456
        %463 = vst [vmem:[#allocation3 + $0x60] sm:$0xff] %v458
        %464 = vst [vmem:[#allocation3 + $0x68] sm:$0xff] %v459
        %465 = vst.msk [vmem:[#allocation3 + $0x70] sm:$0xff] %vm342, %v456
        %466 = vrot.lane.b32.xlu0 %v333, 48
        %v467 = vpop.permute.xlu0 %466
        %468 = vrot.lane.b32.xlu0 %v334, 48
        %v469 = vpop.permute.xlu0 %468
        %470 = vrot.lane.b32.xlu0 %v335, 48
        %v471 = vpop.permute.xlu0 %470
        %vm472 = vcmask 392192
        %v473 = vsel %vm472, %v467, %v469
        %v474 = vsel %vm472, %v469, %v471
        %478 = vst [vmem:[#allocation2 + $0x78] sm:$0xff] %v473
        %479 = vst [vmem:[#allocation2 + $0x80] sm:$0xff] %v474
        %480 = vst.msk [vmem:[#allocation2 + $0x88] sm:$0xff] %vm338, %v471
        %481 = vrot.lane.b32.xlu0 %v333, 123
        %v482 = vpop.permute.xlu0 %481
        %483 = vrot.lane.b32.xlu0 %v334, 123
        %v484 = vpop.permute.xlu0 %483
        %485 = vrot.lane.b32.xlu0 %v335, 123
        %v486 = vpop.permute.xlu0 %485
        %vm487 = vcmask 1006592
        %v488 = vsel %vm487, %v482, %v484
        %v489 = vsel %vm487, %v484, %v486
        %493 = vst [vmem:[#allocation3 + $0x78] sm:$0xff] %v488
        %494 = vst [vmem:[#allocation3 + $0x80] sm:$0xff] %v489
        %495 = vst.msk [vmem:[#allocation3 + $0x88] sm:$0xff] %vm342, %v486
        %496 = vrot.lane.b32.xlu0 %v333, 32
        %v497 = vpop.permute.xlu0 %496
        %498 = vrot.lane.b32.xlu0 %v334, 32
        %v499 = vpop.permute.xlu0 %498
        %500 = vrot.lane.b32.xlu0 %v335, 32
        %v501 = vpop.permute.xlu0 %500
        %vm502 = vcmask 261120
        %v503 = vsel %vm502, %v497, %v499
        %v504 = vsel %vm502, %v499, %v501
        %508 = vst [vmem:[#allocation2 + $0x90] sm:$0xff] %v503
        %509 = vst [vmem:[#allocation2 + $0x98] sm:$0xff] %v504
        %510 = vst.msk [vmem:[#allocation2 + $0xa0] sm:$0xff] %vm338, %v501
        %511 = vrot.lane.b32.xlu0 %v333, 122
        %v512 = vpop.permute.xlu0 %511
        %513 = vrot.lane.b32.xlu0 %v334, 122
        %v514 = vpop.permute.xlu0 %513
        %515 = vrot.lane.b32.xlu0 %v335, 122
        %v516 = vpop.permute.xlu0 %515
        %vm517 = vcmask 998400
        %v518 = vsel %vm517, %v512, %v514
        %v519 = vsel %vm517, %v514, %v516
        %523 = vst [vmem:[#allocation3 + $0x90] sm:$0xff] %v518
        %524 = vst [vmem:[#allocation3 + $0x98] sm:$0xff] %v519
        %525 = vst.msk [vmem:[#allocation3 + $0xa0] sm:$0xff] %vm342, %v516
        %v526 = vld [vmem:[#allocation8] sm:$0xff]
        %v527 = vld [vmem:[#allocation2] sm:$0xff]
        %v528 = vld [vmem:[#allocation2 + $0x8] sm:$0xff]
        %v529 = vld [vmem:[#allocation2 + $0x10] sm:$0xff]
        %v530 = vld [vmem:[#allocation2 + $0x18] sm:$0xff]
        %v531 = vld [vmem:[#allocation2 + $0x20] sm:$0xff]
        %v532 = vld [vmem:[#allocation2 + $0x28] sm:$0xff]
        %v533 = vld [vmem:[#allocation2 + $0x30] sm:$0xff]
        %v534 = vld [vmem:[#allocation2 + $0x38] sm:$0xff]
        %v535 = vld [vmem:[#allocation2 + $0x40] sm:$0xff]
        %v536 = vld [vmem:[#allocation2 + $0x48] sm:$0xff]
        %v537 = vld [vmem:[#allocation2 + $0x50] sm:$0xff]
        %v538 = vld [vmem:[#allocation2 + $0x58] sm:$0xff]
        %v539 = vld [vmem:[#allocation2 + $0x60] sm:$0xff]
        %v540 = vld [vmem:[#allocation2 + $0x68] sm:$0xff]
        %v541 = vld [vmem:[#allocation2 + $0x70] sm:$0xff]
        %v542 = vld [vmem:[#allocation2 + $0x78] sm:$0xff]
        %v543 = vld [vmem:[#allocation2 + $0x80] sm:$0xff]
        %v544 = vld [vmem:[#allocation2 + $0x88] sm:$0xff]
        %v545 = vld [vmem:[#allocation2 + $0x90] sm:$0xff]
        %v546 = vld [vmem:[#allocation2 + $0x98] sm:$0xff]
        %v547 = vld [vmem:[#allocation2 + $0xa0] sm:$0xff]
        %v548 = vld [vmem:[#allocation2 + $0xa8] sm:$0xff]
        %v549 = vld [vmem:[#allocation2 + $0xb0] sm:$0xff]
        %v550 = vld [vmem:[#allocation2 + $0xb8] sm:$0xff]
        %v552 = vsel %vm442, %v526, 0
        %554 = vmatprep.subr.mxu0 %v528
        %555 = vmatpush1.msra.mxu0 %v527
        %556 = vmatprep.subr.mxu0 %v531
        %557 = vmatpush1.msra.mxu0 %v530
        %558 = vmatprep.subr.mxu0 %v534
        %559 = vmatpush1.msra.mxu0 %v533
        %560 = vmatprep.subr.mxu0 %v537
        %561 = vmatpush1.msra.mxu0 %v536
        %562 = vmatprep.subr.mxu0 %v540
        %563 = vmatpush1.msra.mxu0 %v539
        %564 = vmatprep.subr.mxu0 %v543
        %565 = vmatpush1.msra.mxu0 %v542
        %566 = vmatprep.subr.mxu0 %v546
        %567 = vmatpush1.msra.mxu0 %v545
        %568 = vmatprep.subr.mxu0 %v549
        %569 = vmatpush1.msra.mxu0 %v548
        %570 = vmatprep.subr.mxu0 0.0
        %571 = vmatpush1.msra.mxu0 0.0
        %572 = vmatprep.subr.mxu0 0.0
        %573 = vmatpush1.msra.mxu0 0.0
        %574 = vmatprep.subr.mxu0 0.0
        %575 = vmatpush1.msra.mxu0 0.0
        %576 = vmatprep.subr.mxu0 0.0
        %577 = vmatpush1.msra.mxu0 0.0
        %578 = vmatprep.subr.mxu0 0.0
        %579 = vmatpush1.msra.mxu0 0.0
        %580 = vmatprep.subr.mxu0 0.0
        %581 = vmatpush1.msra.mxu0 0.0
        %582 = vmatprep.subr.mxu0 0.0
        %583 = vmatpush1.msra.mxu0 0.0
        %584 = vmatprep.subr.mxu0 0.0
        %585 = vmatpush1.msra.mxu0 0.0
        %586 = vmatprep.subr.mxu0 0.0
        %587 = vmatpush1.msra.mxu0 0.0
        %588 = vmatprep.subr.mxu0 0.0
        %589 = vmatpush1.msra.mxu0 0.0
        %590 = vmatprep.subr.mxu0 0.0
        %591 = vmatpush1.msra.mxu0 0.0
        %592 = vmatprep.subr.mxu0 0.0
        %593 = vmatpush1.msra.mxu0 0.0
        %594 = vmatprep.subr.mxu0 0.0
        %595 = vmatpush1.msra.mxu0 0.0
        %596 = vmatprep.subr.mxu0 0.0
        %597 = vmatpush1.msra.mxu0 0.0
        %598 = vmatprep.subr.mxu0 0.0
        %599 = vmatpush1.msra.mxu0 0.0
        %600 = vmatprep.subr.mxu0 0.0
        %601 = vmatpush1.msra.mxu0 0.0
        %602 = vmatprep.subr.mxu0 0.0
        %603 = vmatpush1.msra.mxu0 0.0
        %604 = vmatprep.subr.mxu0 0.0
        %605 = vmatpush1.msra.mxu0 0.0
        %606 = vmatprep.subr.mxu0 0.0
        %607 = vmatpush1.msra.mxu0 0.0
        %608 = vmatprep.subr.mxu0 0.0
        %609 = vmatpush1.msra.mxu0 0.0
        %610 = vmatprep.subr.mxu0 0.0
        %611 = vmatpush1.msra.mxu0 0.0
        %612 = vmatprep.subr.mxu0 0.0
        %613 = vmatpush1.msra.mxu0 0.0
        %614 = vmatprep.subr.mxu0 0.0
        %615 = vmatpush1.msra.mxu0 0.0
        %616 = vmatprep.subr.mxu0 0.0
        %617 = vmatpush1.msra.mxu0 0.0
        %618 = vmatprep.mubr.f32.mxu0 0.0
        %619 = vmatmul.mubr.f32.gmra.mrb[0].mxu0 %v552
        %v620 = vpop.f32.mrb[0].mxu0
        %v621 = vadd.f32 0.0, %v620
        %v622 = vpop.f32.mrb[0].mxu0
        %v623 = vadd.f32 0.0, %v622
        %624 = vdwg.mxu0
        %625 = vmatprep.subr.mxu0 0.0
        %626 = vmatpush1.msra.mxu0 %v529
        %627 = vmatprep.subr.mxu0 0.0
        %628 = vmatpush1.msra.mxu0 %v532
        %629 = vmatprep.subr.mxu0 0.0
        %630 = vmatpush1.msra.mxu0 %v535
        %631 = vmatprep.subr.mxu0 0.0
        %632 = vmatpush1.msra.mxu0 %v538
        %633 = vmatprep.subr.mxu0 0.0
        %634 = vmatpush1.msra.mxu0 %v541
        %635 = vmatprep.subr.mxu0 0.0
        %636 = vmatpush1.msra.mxu0 %v544
        %637 = vmatprep.subr.mxu0 0.0
        %638 = vmatpush1.msra.mxu0 %v547
        %639 = vmatprep.subr.mxu0 0.0
        %640 = vmatpush1.msra.mxu0 %v550
        %641 = vmatprep.subr.mxu0 0.0
        %642 = vmatpush1.msra.mxu0 0.0
        %643 = vmatprep.subr.mxu0 0.0
        %644 = vmatpush1.msra.mxu0 0.0
        %645 = vmatprep.subr.mxu0 0.0
        %646 = vmatpush1.msra.mxu0 0.0
        %647 = vmatprep.subr.mxu0 0.0
        %648 = vmatpush1.msra.mxu0 0.0
        %649 = vmatprep.subr.mxu0 0.0
        %650 = vmatpush1.msra.mxu0 0.0
        %651 = vmatprep.subr.mxu0 0.0
        %652 = vmatpush1.msra.mxu0 0.0
        %653 = vmatprep.subr.mxu0 0.0
        %654 = vmatpush1.msra.mxu0 0.0
        %655 = vmatprep.subr.mxu0 0.0
        %656 = vmatpush1.msra.mxu0 0.0
        %657 = vmatprep.subr.mxu0 0.0
        %658 = vmatpush1.msra.mxu0 0.0
        %659 = vmatprep.subr.mxu0 0.0
        %660 = vmatpush1.msra.mxu0 0.0
        %661 = vmatprep.subr.mxu0 0.0
        %662 = vmatpush1.msra.mxu0 0.0
        %663 = vmatprep.subr.mxu0 0.0
        %664 = vmatpush1.msra.mxu0 0.0
        %665 = vmatprep.subr.mxu0 0.0
        %666 = vmatpush1.msra.mxu0 0.0
        %667 = vmatprep.subr.mxu0 0.0
        %668 = vmatpush1.msra.mxu0 0.0
        %669 = vmatprep.subr.mxu0 0.0
        %670 = vmatpush1.msra.mxu0 0.0
        %671 = vmatprep.subr.mxu0 0.0
        %672 = vmatpush1.msra.mxu0 0.0
        %673 = vmatprep.subr.mxu0 0.0
        %674 = vmatpush1.msra.mxu0 0.0
        %675 = vmatprep.subr.mxu0 0.0
        %676 = vmatpush1.msra.mxu0 0.0
        %677 = vmatprep.subr.mxu0 0.0
        %678 = vmatpush1.msra.mxu0 0.0
        %679 = vmatprep.subr.mxu0 0.0
        %680 = vmatpush1.msra.mxu0 0.0
        %681 = vmatprep.subr.mxu0 0.0
        %682 = vmatpush1.msra.mxu0 0.0
        %683 = vmatprep.subr.mxu0 0.0
        %684 = vmatpush1.msra.mxu0 0.0
        %685 = vmatprep.subr.mxu0 0.0
        %686 = vmatpush1.msra.mxu0 0.0
        %687 = vmatprep.subr.mxu0 0.0
        %688 = vmatpush1.msra.mxu0 0.0
        %689 = vmatprep.mubr.f32.mxu0 0.0
        %690 = vmatmul.mubr.f32.gmra.mrb[0].mxu0 %v552
        %v691 = vpop.f32.mrb[0].mxu0
        %v692 = vadd.f32 0.0, %v691
        %v693 = vpop.f32.mrb[0].mxu0
        %694 = vdwg.mxu0
        %v695 = vld [vmem:[#allocation10] sm:$0xff]
        %v696 = vld [vmem:[#allocation3] sm:$0xff]
        %v697 = vld [vmem:[#allocation3 + $0x8] sm:$0xff]
        %v698 = vld [vmem:[#allocation3 + $0x10] sm:$0xff]
        %v699 = vld [vmem:[#allocation3 + $0x18] sm:$0xff]
        %v700 = vld [vmem:[#allocation3 + $0x20] sm:$0xff]
        %v701 = vld [vmem:[#allocation3 + $0x28] sm:$0xff]
        %v702 = vld [vmem:[#allocation3 + $0x30] sm:$0xff]
        %v703 = vld [vmem:[#allocation3 + $0x38] sm:$0xff]
        %v704 = vld [vmem:[#allocation3 + $0x40] sm:$0xff]
        %v705 = vld [vmem:[#allocation3 + $0x48] sm:$0xff]
        %v706 = vld [vmem:[#allocation3 + $0x50] sm:$0xff]
        %v707 = vld [vmem:[#allocation3 + $0x58] sm:$0xff]
        %v708 = vld [vmem:[#allocation3 + $0x60] sm:$0xff]
        %v709 = vld [vmem:[#allocation3 + $0x68] sm:$0xff]
        %v710 = vld [vmem:[#allocation3 + $0x70] sm:$0xff]
        %v711 = vld [vmem:[#allocation3 + $0x78] sm:$0xff]
        %v712 = vld [vmem:[#allocation3 + $0x80] sm:$0xff]
        %v713 = vld [vmem:[#allocation3 + $0x88] sm:$0xff]
        %v714 = vld [vmem:[#allocation3 + $0x90] sm:$0xff]
        %v715 = vld [vmem:[#allocation3 + $0x98] sm:$0xff]
        %v716 = vld [vmem:[#allocation3 + $0xa0] sm:$0xff]
        %v717 = vld [vmem:[#allocation3 + $0xa8] sm:$0xff]
        %v718 = vld [vmem:[#allocation3 + $0xb0] sm:$0xff]
        %v719 = vld [vmem:[#allocation3 + $0xb8] sm:$0xff]
        %v721 = vsel %vm442, %v695, 0
        %723 = vmatprep.subr.mxu0 %v697
        %724 = vmatpush1.msra.mxu0 %v696
        %725 = vmatprep.subr.mxu0 %v700
        %726 = vmatpush1.msra.mxu0 %v699
        %727 = vmatprep.subr.mxu0 %v703
        %728 = vmatpush1.msra.mxu0 %v702
        %729 = vmatprep.subr.mxu0 %v706
        %730 = vmatpush1.msra.mxu0 %v705
        %731 = vmatprep.subr.mxu0 %v709
        %732 = vmatpush1.msra.mxu0 %v708
        %733 = vmatprep.subr.mxu0 %v712
        %734 = vmatpush1.msra.mxu0 %v711
        %735 = vmatprep.subr.mxu0 %v715
        %736 = vmatpush1.msra.mxu0 %v714
        %737 = vmatprep.subr.mxu0 %v718
        %738 = vmatpush1.msra.mxu0 %v717
        %739 = vmatprep.subr.mxu0 0.0
        %740 = vmatpush1.msra.mxu0 0.0
        %741 = vmatprep.subr.mxu0 0.0
        %742 = vmatpush1.msra.mxu0 0.0
        %743 = vmatprep.subr.mxu0 0.0
        %744 = vmatpush1.msra.mxu0 0.0
        %745 = vmatprep.subr.mxu0 0.0
        %746 = vmatpush1.msra.mxu0 0.0
        %747 = vmatprep.subr.mxu0 0.0
        %748 = vmatpush1.msra.mxu0 0.0
        %749 = vmatprep.subr.mxu0 0.0
        %750 = vmatpush1.msra.mxu0 0.0
        %751 = vmatprep.subr.mxu0 0.0
        %752 = vmatpush1.msra.mxu0 0.0
        %753 = vmatprep.subr.mxu0 0.0
        %754 = vmatpush1.msra.mxu0 0.0
        %755 = vmatprep.subr.mxu0 0.0
        %756 = vmatpush1.msra.mxu0 0.0
        %757 = vmatprep.subr.mxu0 0.0
        %758 = vmatpush1.msra.mxu0 0.0
        %759 = vmatprep.subr.mxu0 0.0
        %760 = vmatpush1.msra.mxu0 0.0
        %761 = vmatprep.subr.mxu0 0.0
        %762 = vmatpush1.msra.mxu0 0.0
        %763 = vmatprep.subr.mxu0 0.0
        %764 = vmatpush1.msra.mxu0 0.0
        %765 = vmatprep.subr.mxu0 0.0
        %766 = vmatpush1.msra.mxu0 0.0
        %767 = vmatprep.subr.mxu0 0.0
        %768 = vmatpush1.msra.mxu0 0.0
        %769 = vmatprep.subr.mxu0 0.0
        %770 = vmatpush1.msra.mxu0 0.0
        %771 = vmatprep.subr.mxu0 0.0
        %772 = vmatpush1.msra.mxu0 0.0
        %773 = vmatprep.subr.mxu0 0.0
        %774 = vmatpush1.msra.mxu0 0.0
        %775 = vmatprep.subr.mxu0 0.0
        %776 = vmatpush1.msra.mxu0 0.0
        %777 = vmatprep.subr.mxu0 0.0
        %778 = vmatpush1.msra.mxu0 0.0
        %779 = vmatprep.subr.mxu0 0.0
        %780 = vmatpush1.msra.mxu0 0.0
        %781 = vmatprep.subr.mxu0 0.0
        %782 = vmatpush1.msra.mxu0 0.0
        %783 = vmatprep.subr.mxu0 0.0
        %784 = vmatpush1.msra.mxu0 0.0
        %785 = vmatprep.subr.mxu0 0.0
        %786 = vmatpush1.msra.mxu0 0.0
        %787 = vmatprep.mubr.f32.mxu0 0.0
        %788 = vmatmul.mubr.f32.gmra.mrb[0].mxu0 %v721
        %v789 = vpop.f32.mrb[0].mxu0
        %v790 = vadd.f32 0.0, %v789
        %v791 = vpop.f32.mrb[0].mxu0
        %v792 = vadd.f32 0.0, %v791
        %793 = vdwg.mxu0
        %794 = vmatprep.subr.mxu0 0.0
        %795 = vmatpush1.msra.mxu0 %v698
        %796 = vmatprep.subr.mxu0 0.0
        %797 = vmatpush1.msra.mxu0 %v701
        %798 = vmatprep.subr.mxu0 0.0
        %799 = vmatpush1.msra.mxu0 %v704
        %800 = vmatprep.subr.mxu0 0.0
        %801 = vmatpush1.msra.mxu0 %v707
        %802 = vmatprep.subr.mxu0 0.0
        %803 = vmatpush1.msra.mxu0 %v710
        %804 = vmatprep.subr.mxu0 0.0
        %805 = vmatpush1.msra.mxu0 %v713
        %806 = vmatprep.subr.mxu0 0.0
        %807 = vmatpush1.msra.mxu0 %v716
        %808 = vmatprep.subr.mxu0 0.0
        %809 = vmatpush1.msra.mxu0 %v719
        %810 = vmatprep.subr.mxu0 0.0
        %811 = vmatpush1.msra.mxu0 0.0
        %812 = vmatprep.subr.mxu0 0.0
        %813 = vmatpush1.msra.mxu0 0.0
        %814 = vmatprep.subr.mxu0 0.0
        %815 = vmatpush1.msra.mxu0 0.0
        %816 = vmatprep.subr.mxu0 0.0
        %817 = vmatpush1.msra.mxu0 0.0
        %818 = vmatprep.subr.mxu0 0.0
        %819 = vmatpush1.msra.mxu0 0.0
        %820 = vmatprep.subr.mxu0 0.0
        %821 = vmatpush1.msra.mxu0 0.0
        %822 = vmatprep.subr.mxu0 0.0
        %823 = vmatpush1.msra.mxu0 0.0
        %824 = vmatprep.subr.mxu0 0.0
        %825 = vmatpush1.msra.mxu0 0.0
        %826 = vmatprep.subr.mxu0 0.0
        %827 = vmatpush1.msra.mxu0 0.0
        %828 = vmatprep.subr.mxu0 0.0
        %829 = vmatpush1.msra.mxu0 0.0
        %830 = vmatprep.subr.mxu0 0.0
        %831 = vmatpush1.msra.mxu0 0.0
        %832 = vmatprep.subr.mxu0 0.0
        %833 = vmatpush1.msra.mxu0 0.0
        %834 = vmatprep.subr.mxu0 0.0
        %835 = vmatpush1.msra.mxu0 0.0
        %836 = vmatprep.subr.mxu0 0.0
        %837 = vmatpush1.msra.mxu0 0.0
        %838 = vmatprep.subr.mxu0 0.0
        %839 = vmatpush1.msra.mxu0 0.0
        %840 = vmatprep.subr.mxu0 0.0
        %841 = vmatpush1.msra.mxu0 0.0
        %842 = vmatprep.subr.mxu0 0.0
        %843 = vmatpush1.msra.mxu0 0.0
        %844 = vmatprep.subr.mxu0 0.0
        %845 = vmatpush1.msra.mxu0 0.0
        %846 = vmatprep.subr.mxu0 0.0
        %847 = vmatpush1.msra.mxu0 0.0
        %848 = vmatprep.subr.mxu0 0.0
        %849 = vmatpush1.msra.mxu0 0.0
        %850 = vmatprep.subr.mxu0 0.0
        %851 = vmatpush1.msra.mxu0 0.0
        %852 = vmatprep.subr.mxu0 0.0
        %853 = vmatpush1.msra.mxu0 0.0
        %854 = vmatprep.subr.mxu0 0.0
        %855 = vmatpush1.msra.mxu0 0.0
        %856 = vmatprep.subr.mxu0 0.0
        %857 = vmatpush1.msra.mxu0 0.0
        %858 = vmatprep.mubr.f32.mxu0 0.0
        %859 = vmatmul.mubr.f32.gmra.mrb[0].mxu0 %v721
        %v860 = vpop.f32.mrb[0].mxu0
        %v861 = vadd.f32 0.0, %v860
        %v862 = vpop.f32.mrb[0].mxu0
        %863 = vdwg.mxu0
        %v864 = vld [vmem:[%s5] sm:$0x7]
        %v866 = vlaneseq
        %v867 = vshrl.u32 %v866, 7
        %v868 = vsub.s32 0, %v867
        %v869 = vrot.slane %v864, %v868
        %v870 = vlaneseq
        %v871 = vshrl.u32 %v870, 7
        %v872 = vsub.s32 1, %v871
        %v873 = vrot.slane %v864, %v872
        %v874 = vlaneseq
        %v875 = vshrl.u32 %v874, 7
        %v876 = vsub.s32 2, %v875
        %v877 = vrot.slane %v864, %v876
        %v881 = vmul.f32 %v790, %v869
        %v882 = vmul.f32 %v792, %v873
        %v883 = vmul.f32 %v861, %v877
        %v884 = vld [vmem:[#allocation11] ss:$8 sm:$0x3]
        %v886 = vlaneseq
        %v887 = vshrl.u32 %v886, 7
        %v888 = vsub.s32 0, %v887
        %v889 = vrot.slane %v884, %v888
        %v890 = vlaneseq
        %v891 = vshrl.u32 %v890, 7
        %v892 = vsub.s32 1, %v891
        %v893 = vrot.slane %v884, %v892
        %v896 = vmul.f32 %v621, %v889
        %v897 = vmul.f32 %v623, %v893
        %898 = vst [vmem:[#allocation4] sm:$0xff] %v896
        %899 = vst [vmem:[#allocation4 + $0x8] sm:$0xff] %v897
        %900 = vst [vmem:[#allocation4 + $0x70] sm:$0xff] %v881
        %901 = vst [vmem:[#allocation4 + $0x78] sm:$0xff] %v882
        %s902 = scalar_lea.vmem [#allocation11], 1
        %v903 = vld [vmem:[%s902] ss:$8 sm:$0x3]
        %v905 = vlaneseq
        %v906 = vshrl.u32 %v905, 7
        %v907 = vsub.s32 0, %v906
        %v908 = vrot.slane %v903, %v907
        %v909 = vlaneseq
        %v910 = vshrl.u32 %v909, 7
        %v911 = vsub.s32 1, %v910
        %v912 = vrot.slane %v903, %v911
        %913 = vrot.lane.b32.xlu0 %v908, 1
        %v914 = vpop.permute.xlu0 %913
        %915 = vrot.lane.b32.xlu0 %v912, 1
        %v916 = vpop.permute.xlu0 %915
        %vm917 = vcmask 7168
        %v918 = vsel %vm917, %v914, %v916
        %v922 = vmul.f32 %v621, %v914
        %v923 = vmul.f32 %v623, %v918
        %v924 = vmul.f32 %v692, %v916
        %928 = vrot.lane.b32.xlu0 %v922, 127
        %v929 = vpop.permute.xlu0 %928
        %930 = vrot.lane.b32.xlu0 %v923, 127
        %v931 = vpop.permute.xlu0 %930
        %932 = vrot.lane.b32.xlu0 %v924, 127
        %v933 = vpop.permute.xlu0 %932
        %v934 = vsel %vm368, %v929, %v931
        %v935 = vsel %vm368, %v931, %v933
        %938 = vst [vmem:[#allocation4 + $0x10] sm:$0xff] %v934
        %939 = vst [vmem:[#allocation4 + $0x18] sm:$0xff] %v935
        %943 = vrot.lane.b32.xlu0 %v881, 112
        %v944 = vpop.permute.xlu0 %943
        %945 = vrot.lane.b32.xlu0 %v882, 112
        %v946 = vpop.permute.xlu0 %945
        %947 = vrot.lane.b32.xlu0 %v883, 112
        %v948 = vpop.permute.xlu0 %947
        %v949 = vsel %vm353, %v944, %v946
        %v950 = vsel %vm353, %v946, %v948
        %953 = vst [vmem:[#allocation4 + $0x80] sm:$0xff] %v949
        %954 = vst [vmem:[#allocation4 + $0x88] sm:$0xff] %v950
        %s955 = scalar_lea.vmem [#allocation11], 2
        %v956 = vld [vmem:[%s955] ss:$8 sm:$0x3]
        %v958 = vlaneseq
        %v959 = vshrl.u32 %v958, 7
        %v960 = vsub.s32 0, %v959
        %v961 = vrot.slane %v956, %v960
        %v962 = vlaneseq
        %v963 = vshrl.u32 %v962, 7
        %v964 = vsub.s32 1, %v963
        %v965 = vrot.slane %v956, %v964
        %966 = vrot.lane.b32.xlu0 %v961, 2
        %v967 = vpop.permute.xlu0 %966
        %968 = vrot.lane.b32.xlu0 %v965, 2
        %v969 = vpop.permute.xlu0 %968
        %vm970 = vcmask 15360
        %v971 = vsel %vm970, %v967, %v969
        %v975 = vmul.f32 %v621, %v967
        %v976 = vmul.f32 %v623, %v971
        %v977 = vmul.f32 %v692, %v969
        %981 = vrot.lane.b32.xlu0 %v975, 126
        %v982 = vpop.permute.xlu0 %981
        %983 = vrot.lane.b32.xlu0 %v976, 126
        %v984 = vpop.permute.xlu0 %983
        %985 = vrot.lane.b32.xlu0 %v977, 126
        %v986 = vpop.permute.xlu0 %985
        %v987 = vsel %vm397, %v982, %v984
        %v988 = vsel %vm397, %v984, %v986
        %991 = vst [vmem:[#allocation4 + $0x20] sm:$0xff] %v987
        %992 = vst [vmem:[#allocation4 + $0x28] sm:$0xff] %v988
        %993 = vrot.lane.b32.xlu0 %v881, 96
        %v994 = vpop.permute.xlu0 %993
        %995 = vrot.lane.b32.xlu0 %v882, 96
        %v996 = vpop.permute.xlu0 %995
        %997 = vrot.lane.b32.xlu0 %v883, 96
        %v998 = vpop.permute.xlu0 %997
        %v999 = vsel %vm342, %v994, %v996
        %v1000 = vsel %vm342, %v996, %v998
        %1003 = vst [vmem:[#allocation4 + $0x90] sm:$0xff] %v999
        %1004 = vst [vmem:[#allocation4 + $0x98] sm:$0xff] %v1000
        %s1005 = scalar_lea.vmem [#allocation11], 3
        %v1006 = vld [vmem:[%s1005] ss:$8 sm:$0x3]
        %v1008 = vlaneseq
        %v1009 = vshrl.u32 %v1008, 7
        %v1010 = vsub.s32 0, %v1009
        %v1011 = vrot.slane %v1006, %v1010
        %v1012 = vlaneseq
        %v1013 = vshrl.u32 %v1012, 7
        %v1014 = vsub.s32 1, %v1013
        %v1015 = vrot.slane %v1006, %v1014
        %1016 = vrot.lane.b32.xlu0 %v1011, 3
        %v1017 = vpop.permute.xlu0 %1016
        %1018 = vrot.lane.b32.xlu0 %v1015, 3
        %v1019 = vpop.permute.xlu0 %1018
        %vm1020 = vcmask 23552
        %v1021 = vsel %vm1020, %v1017, %v1019
        %v1025 = vmul.f32 %v621, %v1017
        %v1026 = vmul.f32 %v623, %v1021
        %v1027 = vmul.f32 %v692, %v1019
        %1031 = vrot.lane.b32.xlu0 %v1025, 125
        %v1032 = vpop.permute.xlu0 %1031
        %1033 = vrot.lane.b32.xlu0 %v1026, 125
        %v1034 = vpop.permute.xlu0 %1033
        %1035 = vrot.lane.b32.xlu0 %v1027, 125
        %v1036 = vpop.permute.xlu0 %1035
        %v1037 = vsel %vm427, %v1032, %v1034
        %v1038 = vsel %vm427, %v1034, %v1036
        %1041 = vst [vmem:[#allocation4 + $0x30] sm:$0xff] %v1037
        %1042 = vst [vmem:[#allocation4 + $0x38] sm:$0xff] %v1038
        %1043 = vrot.lane.b32.xlu0 %v881, 80
        %v1044 = vpop.permute.xlu0 %1043
        %1045 = vrot.lane.b32.xlu0 %v882, 80
        %v1046 = vpop.permute.xlu0 %1045
        %1047 = vrot.lane.b32.xlu0 %v883, 80
        %v1048 = vpop.permute.xlu0 %1047
        %v1049 = vsel %vm412, %v1044, %v1046
        %v1050 = vsel %vm412, %v1046, %v1048
        %1053 = vst [vmem:[#allocation4 + $0xa0] sm:$0xff] %v1049
        %1054 = vst [vmem:[#allocation4 + $0xa8] sm:$0xff] %v1050
        %s1055 = scalar_lea.vmem [#allocation11], 4
        %v1056 = vld [vmem:[%s1055] ss:$8 sm:$0x3]
        %v1058 = vlaneseq
        %v1059 = vshrl.u32 %v1058, 7
        %v1060 = vsub.s32 0, %v1059
        %v1061 = vrot.slane %v1056, %v1060
        %v1062 = vlaneseq
        %v1063 = vshrl.u32 %v1062, 7
        %v1064 = vsub.s32 1, %v1063
        %v1065 = vrot.slane %v1056, %v1064
        %1066 = vrot.lane.b32.xlu0 %v1061, 4
        %v1067 = vpop.permute.xlu0 %1066
        %1068 = vrot.lane.b32.xlu0 %v1065, 4
        %v1069 = vpop.permute.xlu0 %1068
        %vm1070 = vcmask 31744
        %v1071 = vsel %vm1070, %v1067, %v1069
        %v1075 = vmul.f32 %v621, %v1067
        %v1076 = vmul.f32 %v623, %v1071
        %v1077 = vmul.f32 %v692, %v1069
        %1081 = vrot.lane.b32.xlu0 %v1075, 124
        %v1082 = vpop.permute.xlu0 %1081
        %1083 = vrot.lane.b32.xlu0 %v1076, 124
        %v1084 = vpop.permute.xlu0 %1083
        %1085 = vrot.lane.b32.xlu0 %v1077, 124
        %v1086 = vpop.permute.xlu0 %1085
        %v1087 = vsel %vm457, %v1082, %v1084
        %v1088 = vsel %vm457, %v1084, %v1086
        %1091 = vst [vmem:[#allocation4 + $0x40] sm:$0xff] %v1087
        %1092 = vst [vmem:[#allocation4 + $0x48] sm:$0xff] %v1088
        %1093 = vrot.lane.b32.xlu0 %v881, 64
        %v1094 = vpop.permute.xlu0 %1093
        %1095 = vrot.lane.b32.xlu0 %v882, 64
        %v1096 = vpop.permute.xlu0 %1095
        %1097 = vrot.lane.b32.xlu0 %v883, 64
        %v1098 = vpop.permute.xlu0 %1097
        %v1099 = vsel %vm442, %v1094, %v1096
        %v1100 = vsel %vm442, %v1096, %v1098
        %1103 = vst [vmem:[#allocation4 + $0xb0] sm:$0xff] %v1099
        %1104 = vst [vmem:[#allocation4 + $0xb8] sm:$0xff] %v1100
        %s1105 = scalar_lea.vmem [#allocation11], 5
        %v1106 = vld [vmem:[%s1105] ss:$8 sm:$0x3]
        %v1108 = vlaneseq
        %v1109 = vshrl.u32 %v1108, 7
        %v1110 = vsub.s32 0, %v1109
        %v1111 = vrot.slane %v1106, %v1110
        %v1112 = vlaneseq
        %v1113 = vshrl.u32 %v1112, 7
        %v1114 = vsub.s32 1, %v1113
        %v1115 = vrot.slane %v1106, %v1114
        %1116 = vrot.lane.b32.xlu0 %v1111, 5
        %v1117 = vpop.permute.xlu0 %1116
        %1118 = vrot.lane.b32.xlu0 %v1115, 5
        %v1119 = vpop.permute.xlu0 %1118
        %vm1120 = vcmask 39936
        %v1121 = vsel %vm1120, %v1117, %v1119
        %v1125 = vmul.f32 %v621, %v1117
        %v1126 = vmul.f32 %v623, %v1121
        %v1127 = vmul.f32 %v692, %v1119
        %1131 = vrot.lane.b32.xlu0 %v1125, 123
        %v1132 = vpop.permute.xlu0 %1131
        %1133 = vrot.lane.b32.xlu0 %v1126, 123
        %v1134 = vpop.permute.xlu0 %1133
        %1135 = vrot.lane.b32.xlu0 %v1127, 123
        %v1136 = vpop.permute.xlu0 %1135
        %v1137 = vsel %vm487, %v1132, %v1134
        %v1138 = vsel %vm487, %v1134, %v1136
        %1141 = vst [vmem:[#allocation4 + $0x50] sm:$0xff] %v1137
        %1142 = vst [vmem:[#allocation4 + $0x58] sm:$0xff] %v1138
        %1143 = vrot.lane.b32.xlu0 %v881, 48
        %v1144 = vpop.permute.xlu0 %1143
        %1145 = vrot.lane.b32.xlu0 %v882, 48
        %v1146 = vpop.permute.xlu0 %1145
        %1147 = vrot.lane.b32.xlu0 %v883, 48
        %v1148 = vpop.permute.xlu0 %1147
        %v1149 = vsel %vm472, %v1144, %v1146
        %v1150 = vsel %vm472, %v1146, %v1148
        %1153 = vst [vmem:[#allocation4 + $0xc0] sm:$0xff] %v1149
        %1154 = vst [vmem:[#allocation4 + $0xc8] sm:$0xff] %v1150
        %s1155 = scalar_lea.vmem [#allocation11], 6
        %v1156 = vld [vmem:[%s1155] ss:$8 sm:$0x3]
        %v1158 = vlaneseq
        %v1159 = vshrl.u32 %v1158, 7
        %v1160 = vsub.s32 0, %v1159
        %v1161 = vrot.slane %v1156, %v1160
        %v1162 = vlaneseq
        %v1163 = vshrl.u32 %v1162, 7
        %v1164 = vsub.s32 1, %v1163
        %v1165 = vrot.slane %v1156, %v1164
        %1166 = vrot.lane.b32.xlu0 %v1161, 6
        %v1167 = vpop.permute.xlu0 %1166
        %1168 = vrot.lane.b32.xlu0 %v1165, 6
        %v1169 = vpop.permute.xlu0 %1168
        %v1170 = vsel %vm338, %v1167, %v1169
        %v1174 = vmul.f32 %v621, %v1167
        %v1175 = vmul.f32 %v623, %v1170
        %v1176 = vmul.f32 %v692, %v1169
        %1180 = vrot.lane.b32.xlu0 %v1174, 122
        %v1181 = vpop.permute.xlu0 %1180
        %1182 = vrot.lane.b32.xlu0 %v1175, 122
        %v1183 = vpop.permute.xlu0 %1182
        %1184 = vrot.lane.b32.xlu0 %v1176, 122
        %v1185 = vpop.permute.xlu0 %1184
        %v1186 = vsel %vm517, %v1181, %v1183
        %v1187 = vsel %vm517, %v1183, %v1185
        %1190 = vst [vmem:[#allocation4 + $0x60] sm:$0xff] %v1186
        %1191 = vst [vmem:[#allocation4 + $0x68] sm:$0xff] %v1187
        %1192 = vrot.lane.b32.xlu0 %v881, 32
        %v1193 = vpop.permute.xlu0 %1192
        %1194 = vrot.lane.b32.xlu0 %v882, 32
        %v1195 = vpop.permute.xlu0 %1194
        %1196 = vrot.lane.b32.xlu0 %v883, 32
        %v1197 = vpop.permute.xlu0 %1196
        %v1198 = vsel %vm502, %v1193, %v1195
        %v1199 = vsel %vm502, %v1195, %v1197
        %1202 = vst [vmem:[#allocation4 + $0xd0] sm:$0xff] %v1198
        %1203 = vst [vmem:[#allocation4 + $0xd8] sm:$0xff] %v1199
        %v1204 = vld [vmem:[%s3] sm:$0xff]
        %v1205 = vld [vmem:[#allocation4] sm:$0xff]
        %v1206 = vld [vmem:[#allocation4 + $0x8] sm:$0xff]
        %v1207 = vld [vmem:[#allocation4 + $0x10] sm:$0xff]
        %v1208 = vld [vmem:[#allocation4 + $0x18] sm:$0xff]
        %v1209 = vld [vmem:[#allocation4 + $0x20] sm:$0xff]
        %v1210 = vld [vmem:[#allocation4 + $0x28] sm:$0xff]
        %v1211 = vld [vmem:[#allocation4 + $0x30] sm:$0xff]
        %v1212 = vld [vmem:[#allocation4 + $0x38] sm:$0xff]
        %v1213 = vld [vmem:[#allocation4 + $0x40] sm:$0xff]
        %v1214 = vld [vmem:[#allocation4 + $0x48] sm:$0xff]
        %v1215 = vld [vmem:[#allocation4 + $0x50] sm:$0xff]
        %v1216 = vld [vmem:[#allocation4 + $0x58] sm:$0xff]
        %v1217 = vld [vmem:[#allocation4 + $0x60] sm:$0xff]
        %v1218 = vld [vmem:[#allocation4 + $0x68] sm:$0xff]
        %v1219 = vld [vmem:[#allocation4 + $0x70] sm:$0xff]
        %v1220 = vld [vmem:[#allocation4 + $0x78] sm:$0xff]
        %v1221 = vld [vmem:[#allocation4 + $0x80] sm:$0xff]
        %v1222 = vld [vmem:[#allocation4 + $0x88] sm:$0xff]
        %v1223 = vld [vmem:[#allocation4 + $0x90] sm:$0xff]
        %v1224 = vld [vmem:[#allocation4 + $0x98] sm:$0xff]
        %v1225 = vld [vmem:[#allocation4 + $0xa0] sm:$0xff]
        %v1226 = vld [vmem:[#allocation4 + $0xa8] sm:$0xff]
        %v1227 = vld [vmem:[#allocation4 + $0xb0] sm:$0xff]
        %v1228 = vld [vmem:[#allocation4 + $0xb8] sm:$0xff]
        %v1229 = vld [vmem:[#allocation4 + $0xc0] sm:$0xff]
        %v1230 = vld [vmem:[#allocation4 + $0xc8] sm:$0xff]
        %v1231 = vld [vmem:[#allocation4 + $0xd0] sm:$0xff]
        %v1232 = vld [vmem:[#allocation4 + $0xd8] sm:$0xff]
        %v1233 = vld [vmem:[#allocation4 + $0xe0] sm:$0xff]
        %v1234 = vld [vmem:[#allocation4 + $0xe8] sm:$0xff]
        %vm1235 = vcmask 982016
        %v1237 = vsel %vm1235, %v1204, 0
        %1239 = vmatprep.subr.mxu0 %v1206
        %1240 = vmatpush1.msra.mxu0 %v1205
        %1241 = vmatprep.subr.mxu0 %v1208
        %1242 = vmatpush1.msra.mxu0 %v1207
        %1243 = vmatprep.subr.mxu0 %v1210
        %1244 = vmatpush1.msra.mxu0 %v1209
        %1245 = vmatprep.subr.mxu0 %v1212
        %1246 = vmatpush1.msra.mxu0 %v1211
        %1247 = vmatprep.subr.mxu0 %v1214
        %1248 = vmatpush1.msra.mxu0 %v1213
        %1249 = vmatprep.subr.mxu0 %v1216
        %1250 = vmatpush1.msra.mxu0 %v1215
        %1251 = vmatprep.subr.mxu0 %v1218
        %1252 = vmatpush1.msra.mxu0 %v1217
        %1253 = vmatprep.subr.mxu0 %v1220
        %1254 = vmatpush1.msra.mxu0 %v1219
        %1255 = vmatprep.subr.mxu0 %v1222
        %1256 = vmatpush1.msra.mxu0 %v1221
        %1257 = vmatprep.subr.mxu0 %v1224
        %1258 = vmatpush1.msra.mxu0 %v1223
        %1259 = vmatprep.subr.mxu0 %v1226
        %1260 = vmatpush1.msra.mxu0 %v1225
        %1261 = vmatprep.subr.mxu0 %v1228
        %1262 = vmatpush1.msra.mxu0 %v1227
        %1263 = vmatprep.subr.mxu0 %v1230
        %1264 = vmatpush1.msra.mxu0 %v1229
        %1265 = vmatprep.subr.mxu0 %v1232
        %1266 = vmatpush1.msra.mxu0 %v1231
        %1267 = vmatprep.subr.mxu0 %v1234
        %1268 = vmatpush1.msra.mxu0 %v1233
        %1269 = vmatprep.subr.mxu0 0.0
        %1270 = vmatpush1.msra.mxu0 0.0
        %1271 = vmatprep.subr.mxu0 0.0
        %1272 = vmatpush1.msra.mxu0 0.0
        %1273 = vmatprep.subr.mxu0 0.0
        %1274 = vmatpush1.msra.mxu0 0.0
        %1275 = vmatprep.subr.mxu0 0.0
        %1276 = vmatpush1.msra.mxu0 0.0
        %1277 = vmatprep.subr.mxu0 0.0
        %1278 = vmatpush1.msra.mxu0 0.0
        %1279 = vmatprep.subr.mxu0 0.0
        %1280 = vmatpush1.msra.mxu0 0.0
        %1281 = vmatprep.subr.mxu0 0.0
        %1282 = vmatpush1.msra.mxu0 0.0
        %1283 = vmatprep.subr.mxu0 0.0
        %1284 = vmatpush1.msra.mxu0 0.0
        %1285 = vmatprep.subr.mxu0 0.0
        %1286 = vmatpush1.msra.mxu0 0.0
        %1287 = vmatprep.subr.mxu0 0.0
        %1288 = vmatpush1.msra.mxu0 0.0
        %1289 = vmatprep.subr.mxu0 0.0
        %1290 = vmatpush1.msra.mxu0 0.0
        %1291 = vmatprep.subr.mxu0 0.0
        %1292 = vmatpush1.msra.mxu0 0.0
        %1293 = vmatprep.subr.mxu0 0.0
        %1294 = vmatpush1.msra.mxu0 0.0
        %1295 = vmatprep.subr.mxu0 0.0
        %1296 = vmatpush1.msra.mxu0 0.0
        %1297 = vmatprep.subr.mxu0 0.0
        %1298 = vmatpush1.msra.mxu0 0.0
        %1299 = vmatprep.subr.mxu0 0.0
        %1300 = vmatpush1.msra.mxu0 0.0
        %1301 = vmatprep.subr.mxu0 0.0
        %1302 = vmatpush1.msra.mxu0 0.0
        %1303 = vmatprep.mubr.f32.mxu0 0.0
        %1304 = vmatmul.mubr.f32.gmra.mrb[0].mxu0 %v1237
        %v1305 = vpop.f32.mrb[0].mxu0
        %v1306 = vadd.f32 0.0, %v1305
        %v1307 = vpop.f32.mrb[0].mxu0
        %v1308 = vadd.f32 0.0, %v1307
        %1309 = vdwg.mxu0
        %1310 = vst [vmem:[%s305] sm:$0xff] %v1306
        %1311 = vst [vmem:[%s305 + $0x8] sm:$0xff] %v1308
        %s1312 = sand.u32 %s164, 1
        %s1313 = scalar_lea.sflag [#allocation7], %s1312
        %s1314 = sand.u32 %s164, 1
        %s1315 = smul.addr %s1314, 16
        %s1316 = scalar_lea.vmem [#allocation13], %s1315
        // Predicated region
        $region61: #{tpu_custom_call.1} parent=43 // pred_check
          %p1317 = pneg %p174
        $region62: #{tpu_custom_call.1} parent=43 // pred_check_branch
          %1319 = sbr.rel (%p1317) target = $region64
        $region63: #{tpu_custom_call.1} parent=43 // pred_region
          %s1321 = ssub.s32 256, 256
          %1322 = vsyncadd %s1313, %s1321
          %s1323 = smul.addr %s25, 2
          %s1324 = smul.addr %s1323, 128
          %s1325 = scalar_lea.hbm %s6, %s1324
          %s1327 = sshll.u32 %s1316, 4
          %s1328 = int_to_ptr.vmem [resolvable:$true] %s1327
          %1330 = dma.vmem_to_hbm [thread:$0]  %s1328, 256, %s1325, %s1313
        $region64: #{tpu_custom_call.1} parent=43 // pred_fallthru
          _
      $region44: #{tpu_custom_call.1} parent=5 // pred_fallthru
        _
      %p1331 = scmp.le.s32.totalorder 2, %s20
      // Predicated region
      $region65: #{tpu_custom_call.1} parent=5 // pred_check
        %p1332 = pneg %p1331
      $region66: #{tpu_custom_call.1} parent=5 // pred_check_branch
        %1334 = sbr.rel (%p1332) target = $region68
      $region67: #{tpu_custom_call.1} parent=5 // pred_region
        %s1335 = ssub.s32 %s20, 2
        // Predicated region
        $region69: #{tpu_custom_call.1} parent=67 // pred_check
          %p1336 = pneg %p180
        $region70: #{tpu_custom_call.1} parent=67 // pred_check_branch
          %1338 = sbr.rel (%p1336) target = $region72
        $region71: #{tpu_custom_call.1} parent=67 // pred_region
          %s1339 = sand.u32 %s165, 1
          %s1340 = scalar_lea.sflag [#allocation7], %s1339
          %s1341 = sand.u32 %s165, 1
          %s1342 = smul.addr %s1341, 16
          %s1343 = scalar_lea.vmem [#allocation13], %s1342
          %1344 = dma.done %s1340, 256
        $region72: #{tpu_custom_call.1} parent=67 // pred_fallthru
          _
      $region68: #{tpu_custom_call.1} parent=5 // pred_fallthru
        _
    $region6: #{tpu_custom_call.1} parent=1 // loop_footer
      %s24 = sadd.s32 1, %s20
    $region7: #{tpu_custom_call.1} parent=1 // loop_footer_branch
      %19 = sbr.rel target = $region3
    $region8: #{tpu_custom_call.1} parent=1 // loop_exit
      _
    %1345 = vsyncpa [#allocation6], 1
    %s1346 = scalar_lea.sflag [#allocation6], 1
    %1347 = vsyncpa %s1346, 1
    %1348 = vsyncpa [#allocation9], 1
    %1349 = vsyncpa [#allocation12], 1
    %1350 = vsyncpa [#allocation7], 1
    %s1351 = scalar_lea.sflag [#allocation7], 1
    %1352 = vsyncpa %s1351, 1

</llo_original>
